<compile_context>
chip_gen: v6e
topology: v6e:2x2x1
jax: 0.10.0
libtpu: 0.0.40
codegen_flags: <defaults>
</compile_context>

<pallas_src>
import functools

import jax
import jax.numpy as jnp
import numpy as np
from jax.experimental import pallas as pl
from jax.experimental.pallas import tpu as pltpu


def _flatten_taps(w, kH, kW):
    """Flip (transpose-conv -> correlation) and flatten a (gc, kH, kW) depthwise filter.

    Returns a (gc, kH*kW) tap table plus the matching static list of (dh, dw) offsets.
    """
    wf = w[:, ::-1, ::-1]
    taps = tuple((a - kH // 2, b - kW // 2) for a in range(kH) for b in range(kW))
    return wf.reshape(w.shape[0], kH * kW), taps


def _make_kernel(H, W, c_blk, taps_hw, taps_w, taps_h):
    """One grid step = one (batch, branch, channel-tile): depthwise 'same' correlation."""
    HW = H * W

    def tap_mask(row, col, dh, dw):
        # Validity of x[h+dh, w+dw] for every flat position; None means always valid.
        conds = []
        if dh > 0:
            conds.append(row < H - dh)
        elif dh < 0:
            conds.append(row >= -dh)
        if dw > 0:
            conds.append(col < W - dw)
        elif dw < 0:
            conds.append(col >= -dw)
        if not conds:
            return None
        m = conds[0]
        for c in conds[1:]:
            m = jnp.logical_and(m, c)
        return m

    def branch(x, row, col, w_ref, b_ref, taps):
        # x: (c_blk, HW) f32.  y[c, h*W+w] = sum_t x[c, h+dh_t, w+dw_t] * w[c, t] + b[c]
        w = w_ref[...].astype(jnp.float32)                 # (c_blk, n_taps), VMEM resident
        acc = jnp.zeros_like(x)
        for t, (dh, dw) in enumerate(taps):
            s = dh * W + dw
            # rolled[p] = x[p + s]  (jnp.roll semantics: out[i] = in[i - shift])
            v = x if s == 0 else pltpu.roll(x, (-s) % HW, axis=1)   # XLU lane rotate
            m = tap_mask(row, col, dh, dw)
            if m is not None:
                v = jnp.where(m, v, 0.0)                   # zero the wrapped halo
            acc = acc + v * w[:, t:t + 1]                  # per-channel scalar MAC (VPU)
        return acc + b_ref[...].astype(jnp.float32)        # (c_blk, 1) bias broadcast

    def kernel(rc_ref, w_hw_ref, w_w_ref, w_h_ref,
               b_hw_ref, b_w_ref, b_h_ref, x_ref, o_ref):
        br = pl.program_id(1)                              # which inception branch
        x = x_ref[...].astype(jnp.float32)                 # (c_blk, HW)
        row = rc_ref[0:1, :]                               # (1, HW) row index per flat pos
        col = rc_ref[1:2, :]                               # (1, HW) col index per flat pos

        @pl.when(br == 0)
        def _():
            o_ref[...] = branch(x, row, col, w_hw_ref, b_hw_ref, taps_hw).astype(o_ref.dtype)

        @pl.when(br == 1)
        def _():
            o_ref[...] = branch(x, row, col, w_w_ref, b_w_ref, taps_w).astype(o_ref.dtype)

        @pl.when(br == 2)
        def _():
            o_ref[...] = branch(x, row, col, w_h_ref, b_h_ref, taps_h).astype(o_ref.dtype)

    return kernel


def _pick_c_blk(gc, id_c, hw, itemsize):
    """Largest multiple-of-8 channel tile that divides gc, keeps id_c block-aligned and
    keeps the per-step block comfortably inside VMEM (double-buffered in + out)."""
    cands = [d for d in range(8, gc + 1, 8) if gc % d == 0 and id_c % d == 0]
    if not cands:
        # TODO(synk): general gc via 4-D (1, gc, H, W) blocks (channel off the sublane axis).
        raise NotImplementedError(
            f"gc={gc} and id_c={id_c} must both be multiples of 8 for this kernel")
    budget = 8 * 1024 * 1024  # bytes for one x block; conservative even for v7x (64 MiB VMEM)
    fitting = [d for d in cands if d * hw * itemsize <= budget]
    return max(fitting) if fitting else min(cands)


def init_params(key, in_channels, square_kernel_size=3, band_kernel_size=11,
                branch_ratio=0.125):
    gc = int(in_channels * branch_ratio)
    ks = jax.random.split(key, 6)
    scale = 0.1
    params = {
        "w_hw": scale * jax.random.normal(ks[0], (gc, square_kernel_size, square_kernel_size), jnp.float32),
        "b_hw": scale * jax.random.normal(ks[1], (gc,), jnp.float32),
        "w_w": scale * jax.random.normal(ks[2], (gc, 1, band_kernel_size), jnp.float32),
        "b_w": scale * jax.random.normal(ks[3], (gc,), jnp.float32),
        "w_h": scale * jax.random.normal(ks[4], (gc, band_kernel_size, 1), jnp.float32),
        "b_h": scale * jax.random.normal(ks[5], (gc,), jnp.float32),
    }
    split_indexes = (in_channels - 3 * gc, gc, gc, gc)
    return params, split_indexes


@functools.partial(jax.jit, static_argnames=("split_indexes", "sq", "band"))
def inception_dwconv_transpose2d(x, params, *, split_indexes, sq=3, band=11):
    """Forward pass matching InceptionDWConvTranspose2d.forward (NCHW in / NCHW out)."""
    # ConvTranspose2d(stride=1, padding=k//2) == correlation with flipped kernel only for odd k.
    assert sq % 2 == 1 and band % 2 == 1, "kernel sizes must be odd"
    N, C, H, W = x.shape
    HW = H * W
    id_c, gc, _, _ = split_indexes
    c_blk = _pick_c_blk(gc, id_c, HW, x.dtype.itemsize)
    n_ct = gc // c_blk

    # Parameter glue (tiny): flip + flatten into per-branch (gc, n_taps) tap tables.
    w_hw, taps_hw = _flatten_taps(params["w_hw"], sq, sq)
    w_w, taps_w = _flatten_taps(params["w_w"], 1, band)
    w_h, taps_h = _flatten_taps(params["w_h"], band, 1)
    b_hw = params["b_hw"].reshape(gc, 1)
    b_w = params["b_w"].reshape(gc, 1)
    b_h = params["b_h"].reshape(gc, 1)

    # Row / column index of every flattened spatial position (for the halo edge masks).
    rc = jnp.stack([jnp.repeat(jnp.arange(H, dtype=jnp.int32), W),
                    jnp.tile(jnp.arange(W, dtype=jnp.int32), H)], axis=0)   # (2, HW)

    x_flat = x.reshape(N, C, HW)                   # free reshape, stays NCHW

    ch0 = id_c // c_blk                            # first conv-channel block
    conv_spec = pl.BlockSpec(
        (None, c_blk, HW), lambda n, br, ct: (n, ch0 + br * n_ct + ct, 0))
    wspec = lambda nt: pl.BlockSpec((c_blk, nt), lambda n, br, ct: (ct, 0))
    bspec = pl.BlockSpec((c_blk, 1), lambda n, br, ct: (ct, 0))
    rcspec = pl.BlockSpec((2, HW), lambda n, br, ct: (0, 0))

    y = pl.pallas_call(
        _make_kernel(H, W, c_blk, taps_hw, taps_w, taps_h),
        out_shape=jax.ShapeDtypeStruct((N, C, HW), x.dtype),
        grid=(N, 3, n_ct),
        in_specs=[rcspec,
                  wspec(sq * sq), wspec(band), wspec(band),
                  bspec, bspec, bspec,
                  conv_spec],
        out_specs=conv_spec,
        # x is aliased to the output: identity channels pass through untouched, only the
        # 3*gc conv channel blocks are ever read/written by the kernel (no concat pass).
        input_output_aliases={7: 0},
        compiler_params=pltpu.CompilerParams(
            dimension_semantics=("parallel", "parallel", "parallel")),
    )(rc, w_hw, w_w, w_h, b_hw, b_w, b_h, x_flat)

    return y.reshape(N, C, H, W)


# ----------------------------- pure-JAX reference ---------------------------------------


def _ref_dwconv_transpose2d(x, w, bias, kH, kW):
    ph, pw = kH // 2, kW // 2
    w_flip = w[:, ::-1, ::-1][:, None]             # (C, 1, kH, kW)
    y = jax.lax.conv_general_dilated(
        x, w_flip, window_strides=(1, 1), padding=[(ph, ph), (pw, pw)],
        dimension_numbers=("NCHW", "OIHW", "NCHW"),
        feature_group_count=x.shape[1])
    return y + bias[None, :, None, None]


def _ref_forward(x, params, split_indexes, sq=3, band=11):
    id_c, gc, _, _ = split_indexes
    x_id = x[:, :id_c]
    x_hw = x[:, id_c:id_c + gc]
    x_w = x[:, id_c + gc:id_c + 2 * gc]
    x_h = x[:, id_c + 2 * gc:id_c + 3 * gc]
    return jnp.concatenate([
        x_id,
        _ref_dwconv_transpose2d(x_hw, params["w_hw"], params["b_hw"], sq, sq),
        _ref_dwconv_transpose2d(x_w, params["w_w"], params["b_w"], 1, band),
        _ref_dwconv_transpose2d(x_h, params["w_h"], params["b_h"], band, 1),
    ], axis=1)


if __name__ == "__main__":
    key = jax.random.PRNGKey(0)
    k_x, k_p = jax.random.split(key)

    # gc = int(64 * 0.125) = 8 channels per conv branch, 40 identity channels.
    N, C, H, W = 2, 64, 16, 16
    square_k, band_k = 3, 11

    x = jax.random.normal(k_x, (N, C, H, W), jnp.float32)
    params, split_indexes = init_params(k_p, C, square_k, band_k)

    out = inception_dwconv_transpose2d(
        x, params, split_indexes=split_indexes, sq=square_k, band=band_k)
    out = jax.block_until_ready(out)
    assert out.shape == (N, C, H, W), out.shape

    ref = jax.block_until_ready(_ref_forward(x, params, split_indexes, square_k, band_k))
    np.testing.assert_allclose(np.asarray(out), np.asarray(ref), atol=1e-5, rtol=1e-5)

    print("KERNEL_OK")
</pallas_src>

<mosaic_0001>
module attributes {stable_mosaic.version = 11 : i64} {
  func.func @kernel(%arg0: i32, %arg1: i32, %arg2: i32, %arg3: memref<2x256xi32, #tpu.memory_space<vmem>>, %arg4: memref<8x9xf32, #tpu.memory_space<vmem>>, %arg5: memref<8x11xf32, #tpu.memory_space<vmem>>, %arg6: memref<8x11xf32, #tpu.memory_space<vmem>>, %arg7: memref<8x1xf32, #tpu.memory_space<vmem>>, %arg8: memref<8x1xf32, #tpu.memory_space<vmem>>, %arg9: memref<8x1xf32, #tpu.memory_space<vmem>>, %arg10: memref<1x8x256xf32, #tpu.memory_space<vmem>>, %arg11: memref<1x8x256xf32, #tpu.memory_space<vmem>>) attributes {dimension_semantics = [#tpu.dimension_semantics<parallel>, #tpu.dimension_semantics<parallel>, #tpu.dimension_semantics<parallel>], iteration_bounds = array<i64: 2, 3, 1>, scalar_prefetch = 0 : i64, scratch_operands = 0 : i64, tpu.core_type = #tpu.core_type<tc>, window_params = [{pipeline_mode = #tpu.pipeline_mode<synchronous>, transform_indices = @transform_0, window_bounds = array<i64: 2, 256>}, {transform_indices = @transform_1, window_bounds = array<i64: 8, 9>}, {transform_indices = @transform_2, window_bounds = array<i64: 8, 11>}, {transform_indices = @transform_3, window_bounds = array<i64: 8, 11>}, {transform_indices = @transform_4, window_bounds = array<i64: 8, 1>}, {transform_indices = @transform_5, window_bounds = array<i64: 8, 1>}, {transform_indices = @transform_6, window_bounds = array<i64: 8, 1>}, {transform_indices = @transform_7, window_bounds = array<i64: 1, 8, 256>}, {transform_indices = @transform_8, window_bounds = array<i64: 1, 8, 256>}]} {
    %c0 = arith.constant 0 : index
    %c0_0 = arith.constant 0 : index
    %c0_1 = arith.constant 0 : index
    %0 = vector.load %arg10[%c0, %c0_0, %c0_1] : memref<1x8x256xf32, #tpu.memory_space<vmem>>, vector<1x8x256xf32>
    %1 = vector.shape_cast %0 : vector<1x8x256xf32> to vector<8x256xf32>
    %c0_2 = arith.constant 0 : index
    %c0_3 = arith.constant 0 : index
    %2 = vector.load %arg3[%c0_2, %c0_3] : memref<2x256xi32, #tpu.memory_space<vmem>>, vector<1x256xi32>
    %c1 = arith.constant 1 : index
    %c0_4 = arith.constant 0 : index
    %3 = vector.load %arg3[%c1, %c0_4] : memref<2x256xi32, #tpu.memory_space<vmem>>, vector<1x256xi32>
    %c0_i32 = arith.constant 0 : i32
    %4 = arith.cmpi eq, %arg1, %c0_i32 : i32
    %5 = arith.extui %4 : i1 to i32
    %c0_i32_5 = arith.constant 0 : i32
    %6 = arith.cmpi ne, %5, %c0_i32_5 : i32
    scf.if %6 {
      %c0_8 = arith.constant 0 : index
      %c0_9 = arith.constant 0 : index
      %13 = vector.load %arg4[%c0_8, %c0_9] : memref<8x9xf32, #tpu.memory_space<vmem>>, vector<8x9xf32>
      %cst = arith.constant 0.000000e+00 : f32
      %14 = vector.broadcast %cst : f32 to vector<8x256xf32>
      %c17_i32 = arith.constant 17 : i32
      %15 = tpu.dynamic_rotate %1 by %c17_i32 dim 1 : vector<8x256xf32>, i32 -> vector<8x256xf32>
      %c1_i32_10 = arith.constant 1 : i32
      %16 = vector.broadcast %c1_i32_10 : i32 to vector<1x256xi32>
      %17 = arith.cmpi sge, %2, %16 : vector<1x256xi32>
      %c1_i32_11 = arith.constant 1 : i32
      %18 = vector.broadcast %c1_i32_11 : i32 to vector<1x256xi32>
      %19 = arith.cmpi sge, %3, %18 : vector<1x256xi32>
      %20 = arith.andi %17, %19 : vector<1x256xi1>
      %cst_12 = arith.constant 0.000000e+00 : f32
      %21 = vector.shape_cast %20 : vector<1x256xi1> to vector<1x256xi1>
      %22 = vector.broadcast %21 : vector<1x256xi1> to vector<8x256xi1>
      %23 = vector.broadcast %cst_12 : f32 to vector<8x256xf32>
      %24 = arith.select %22, %15, %23 : vector<8x256xi1>, vector<8x256xf32>
      %25 = vector.extract_strided_slice %13 {offsets = [0, 0], sizes = [8, 1], strides = [1, 1]} : vector<8x9xf32> to vector<8x1xf32>
      %26 = vector.broadcast %25 : vector<8x1xf32> to vector<8x256xf32>
      %27 = arith.mulf %24, %26 : vector<8x256xf32>
      %28 = arith.addf %14, %27 : vector<8x256xf32>
      %c16_i32 = arith.constant 16 : i32
      %29 = tpu.dynamic_rotate %1 by %c16_i32 dim 1 : vector<8x256xf32>, i32 -> vector<8x256xf32>
      %c1_i32_13 = arith.constant 1 : i32
      %30 = vector.broadcast %c1_i32_13 : i32 to vector<1x256xi32>
      %31 = arith.cmpi sge, %2, %30 : vector<1x256xi32>
      %cst_14 = arith.constant 0.000000e+00 : f32
      %32 = vector.shape_cast %31 : vector<1x256xi1> to vector<1x256xi1>
      %33 = vector.broadcast %32 : vector<1x256xi1> to vector<8x256xi1>
      %34 = vector.broadcast %cst_14 : f32 to vector<8x256xf32>
      %35 = arith.select %33, %29, %34 : vector<8x256xi1>, vector<8x256xf32>
      %36 = vector.extract_strided_slice %13 {offsets = [0, 1], sizes = [8, 1], strides = [1, 1]} : vector<8x9xf32> to vector<8x1xf32>
      %37 = vector.broadcast %36 : vector<8x1xf32> to vector<8x256xf32>
      %38 = arith.mulf %35, %37 : vector<8x256xf32>
      %39 = arith.addf %28, %38 : vector<8x256xf32>
      %c15_i32 = arith.constant 15 : i32
      %40 = tpu.dynamic_rotate %1 by %c15_i32 dim 1 : vector<8x256xf32>, i32 -> vector<8x256xf32>
      %c1_i32_15 = arith.constant 1 : i32
      %41 = vector.broadcast %c1_i32_15 : i32 to vector<1x256xi32>
      %42 = arith.cmpi sge, %2, %41 : vector<1x256xi32>
      %c15_i32_16 = arith.constant 15 : i32
      %43 = vector.broadcast %c15_i32_16 : i32 to vector<1x256xi32>
      %44 = arith.cmpi slt, %3, %43 : vector<1x256xi32>
      %45 = arith.andi %42, %44 : vector<1x256xi1>
      %cst_17 = arith.constant 0.000000e+00 : f32
      %46 = vector.shape_cast %45 : vector<1x256xi1> to vector<1x256xi1>
      %47 = vector.broadcast %46 : vector<1x256xi1> to vector<8x256xi1>
      %48 = vector.broadcast %cst_17 : f32 to vector<8x256xf32>
      %49 = arith.select %47, %40, %48 : vector<8x256xi1>, vector<8x256xf32>
      %50 = vector.extract_strided_slice %13 {offsets = [0, 2], sizes = [8, 1], strides = [1, 1]} : vector<8x9xf32> to vector<8x1xf32>
      %51 = vector.broadcast %50 : vector<8x1xf32> to vector<8x256xf32>
      %52 = arith.mulf %49, %51 : vector<8x256xf32>
      %53 = arith.addf %39, %52 : vector<8x256xf32>
      %c1_i32_18 = arith.constant 1 : i32
      %54 = tpu.dynamic_rotate %1 by %c1_i32_18 dim 1 : vector<8x256xf32>, i32 -> vector<8x256xf32>
      %c1_i32_19 = arith.constant 1 : i32
      %55 = vector.broadcast %c1_i32_19 : i32 to vector<1x256xi32>
      %56 = arith.cmpi sge, %3, %55 : vector<1x256xi32>
      %cst_20 = arith.constant 0.000000e+00 : f32
      %57 = vector.shape_cast %56 : vector<1x256xi1> to vector<1x256xi1>
      %58 = vector.broadcast %57 : vector<1x256xi1> to vector<8x256xi1>
      %59 = vector.broadcast %cst_20 : f32 to vector<8x256xf32>
      %60 = arith.select %58, %54, %59 : vector<8x256xi1>, vector<8x256xf32>
      %61 = vector.extract_strided_slice %13 {offsets = [0, 3], sizes = [8, 1], strides = [1, 1]} : vector<8x9xf32> to vector<8x1xf32>
      %62 = vector.broadcast %61 : vector<8x1xf32> to vector<8x256xf32>
      %63 = arith.mulf %60, %62 : vector<8x256xf32>
      %64 = arith.addf %53, %63 : vector<8x256xf32>
      %65 = vector.extract_strided_slice %13 {offsets = [0, 4], sizes = [8, 1], strides = [1, 1]} : vector<8x9xf32> to vector<8x1xf32>
      %66 = vector.broadcast %65 : vector<8x1xf32> to vector<8x256xf32>
      %67 = arith.mulf %1, %66 : vector<8x256xf32>
      %68 = arith.addf %64, %67 : vector<8x256xf32>
      %c255_i32 = arith.constant 255 : i32
      %69 = tpu.dynamic_rotate %1 by %c255_i32 dim 1 : vector<8x256xf32>, i32 -> vector<8x256xf32>
      %c15_i32_21 = arith.constant 15 : i32
      %70 = vector.broadcast %c15_i32_21 : i32 to vector<1x256xi32>
      %71 = arith.cmpi slt, %3, %70 : vector<1x256xi32>
      %cst_22 = arith.constant 0.000000e+00 : f32
      %72 = vector.shape_cast %71 : vector<1x256xi1> to vector<1x256xi1>
      %73 = vector.broadcast %72 : vector<1x256xi1> to vector<8x256xi1>
      %74 = vector.broadcast %cst_22 : f32 to vector<8x256xf32>
      %75 = arith.select %73, %69, %74 : vector<8x256xi1>, vector<8x256xf32>
      %76 = vector.extract_strided_slice %13 {offsets = [0, 5], sizes = [8, 1], strides = [1, 1]} : vector<8x9xf32> to vector<8x1xf32>
      %77 = vector.broadcast %76 : vector<8x1xf32> to vector<8x256xf32>
      %78 = arith.mulf %75, %77 : vector<8x256xf32>
      %79 = arith.addf %68, %78 : vector<8x256xf32>
      %c241_i32 = arith.constant 241 : i32
      %80 = tpu.dynamic_rotate %1 by %c241_i32 dim 1 : vector<8x256xf32>, i32 -> vector<8x256xf32>
      %c15_i32_23 = arith.constant 15 : i32
      %81 = vector.broadcast %c15_i32_23 : i32 to vector<1x256xi32>
      %82 = arith.cmpi slt, %2, %81 : vector<1x256xi32>
      %c1_i32_24 = arith.constant 1 : i32
      %83 = vector.broadcast %c1_i32_24 : i32 to vector<1x256xi32>
      %84 = arith.cmpi sge, %3, %83 : vector<1x256xi32>
      %85 = arith.andi %82, %84 : vector<1x256xi1>
      %cst_25 = arith.constant 0.000000e+00 : f32
      %86 = vector.shape_cast %85 : vector<1x256xi1> to vector<1x256xi1>
      %87 = vector.broadcast %86 : vector<1x256xi1> to vector<8x256xi1>
      %88 = vector.broadcast %cst_25 : f32 to vector<8x256xf32>
      %89 = arith.select %87, %80, %88 : vector<8x256xi1>, vector<8x256xf32>
      %90 = vector.extract_strided_slice %13 {offsets = [0, 6], sizes = [8, 1], strides = [1, 1]} : vector<8x9xf32> to vector<8x1xf32>
      %91 = vector.broadcast %90 : vector<8x1xf32> to vector<8x256xf32>
      %92 = arith.mulf %89, %91 : vector<8x256xf32>
      %93 = arith.addf %79, %92 : vector<8x256xf32>
      %c240_i32 = arith.constant 240 : i32
      %94 = tpu.dynamic_rotate %1 by %c240_i32 dim 1 : vector<8x256xf32>, i32 -> vector<8x256xf32>
      %c15_i32_26 = arith.constant 15 : i32
      %95 = vector.broadcast %c15_i32_26 : i32 to vector<1x256xi32>
      %96 = arith.cmpi slt, %2, %95 : vector<1x256xi32>
      %cst_27 = arith.constant 0.000000e+00 : f32
      %97 = vector.shape_cast %96 : vector<1x256xi1> to vector<1x256xi1>
      %98 = vector.broadcast %97 : vector<1x256xi1> to vector<8x256xi1>
      %99 = vector.broadcast %cst_27 : f32 to vector<8x256xf32>
      %100 = arith.select %98, %94, %99 : vector<8x256xi1>, vector<8x256xf32>
      %101 = vector.extract_strided_slice %13 {offsets = [0, 7], sizes = [8, 1], strides = [1, 1]} : vector<8x9xf32> to vector<8x1xf32>
      %102 = vector.broadcast %101 : vector<8x1xf32> to vector<8x256xf32>
      %103 = arith.mulf %100, %102 : vector<8x256xf32>
      %104 = arith.addf %93, %103 : vector<8x256xf32>
      %c239_i32 = arith.constant 239 : i32
      %105 = tpu.dynamic_rotate %1 by %c239_i32 dim 1 : vector<8x256xf32>, i32 -> vector<8x256xf32>
      %c15_i32_28 = arith.constant 15 : i32
      %106 = vector.broadcast %c15_i32_28 : i32 to vector<1x256xi32>
      %107 = arith.cmpi slt, %2, %106 : vector<1x256xi32>
      %c15_i32_29 = arith.constant 15 : i32
      %108 = vector.broadcast %c15_i32_29 : i32 to vector<1x256xi32>
      %109 = arith.cmpi slt, %3, %108 : vector<1x256xi32>
      %110 = arith.andi %107, %109 : vector<1x256xi1>
      %cst_30 = arith.constant 0.000000e+00 : f32
      %111 = vector.shape_cast %110 : vector<1x256xi1> to vector<1x256xi1>
      %112 = vector.broadcast %111 : vector<1x256xi1> to vector<8x256xi1>
      %113 = vector.broadcast %cst_30 : f32 to vector<8x256xf32>
      %114 = arith.select %112, %105, %113 : vector<8x256xi1>, vector<8x256xf32>
      %115 = vector.extract_strided_slice %13 {offsets = [0, 8], sizes = [8, 1], strides = [1, 1]} : vector<8x9xf32> to vector<8x1xf32>
      %116 = vector.broadcast %115 : vector<8x1xf32> to vector<8x256xf32>
      %117 = arith.mulf %114, %116 : vector<8x256xf32>
      %118 = arith.addf %104, %117 : vector<8x256xf32>
      %c0_31 = arith.constant 0 : index
      %c0_32 = arith.constant 0 : index
      %119 = vector.load %arg7[%c0_31, %c0_32] : memref<8x1xf32, #tpu.memory_space<vmem>>, vector<8x1xf32>
      %120 = vector.broadcast %119 : vector<8x1xf32> to vector<8x256xf32>
      %121 = arith.addf %118, %120 : vector<8x256xf32>
      %c0_33 = arith.constant 0 : index
      %c0_34 = arith.constant 0 : index
      %c0_35 = arith.constant 0 : index
      %122 = vector.load %arg11[%c0_33, %c0_34, %c0_35] : memref<1x8x256xf32, #tpu.memory_space<vmem>>, vector<1x8x256xf32>
      %123 = vector.shape_cast %122 : vector<1x8x256xf32> to vector<8x256xf32>
      %124 = vector.shape_cast %121 : vector<8x256xf32> to vector<1x8x256xf32>
      tpu.vector_store %arg11[%c0_33, %c0_34, %c0_35], %124 {strides = array<i32>} : memref<1x8x256xf32, #tpu.memory_space<vmem>>, vector<1x8x256xf32>,
    } else {
    }
    %c1_i32 = arith.constant 1 : i32
    %7 = arith.cmpi eq, %arg1, %c1_i32 : i32
    %8 = arith.extui %7 : i1 to i32
    %c0_i32_6 = arith.constant 0 : i32
    %9 = arith.cmpi ne, %8, %c0_i32_6 : i32
    scf.if %9 {
      %c0_8 = arith.constant 0 : index
      %c0_9 = arith.constant 0 : index
      %13 = vector.load %arg5[%c0_8, %c0_9] : memref<8x11xf32, #tpu.memory_space<vmem>>, vector<8x11xf32>
      %cst = arith.constant 0.000000e+00 : f32
      %14 = vector.broadcast %cst : f32 to vector<8x256xf32>
      %c5_i32 = arith.constant 5 : i32
      %15 = tpu.dynamic_rotate %1 by %c5_i32 dim 1 : vector<8x256xf32>, i32 -> vector<8x256xf32>
      %c5_i32_10 = arith.constant 5 : i32
      %16 = vector.broadcast %c5_i32_10 : i32 to vector<1x256xi32>
      %17 = arith.cmpi sge, %3, %16 : vector<1x256xi32>
      %cst_11 = arith.constant 0.000000e+00 : f32
      %18 = vector.shape_cast %17 : vector<1x256xi1> to vector<1x256xi1>
      %19 = vector.broadcast %18 : vector<1x256xi1> to vector<8x256xi1>
      %20 = vector.broadcast %cst_11 : f32 to vector<8x256xf32>
      %21 = arith.select %19, %15, %20 : vector<8x256xi1>, vector<8x256xf32>
      %22 = vector.extract_strided_slice %13 {offsets = [0, 0], sizes = [8, 1], strides = [1, 1]} : vector<8x11xf32> to vector<8x1xf32>
      %23 = vector.broadcast %22 : vector<8x1xf32> to vector<8x256xf32>
      %24 = arith.mulf %21, %23 : vector<8x256xf32>
      %25 = arith.addf %14, %24 : vector<8x256xf32>
      %c4_i32 = arith.constant 4 : i32
      %26 = tpu.dynamic_rotate %1 by %c4_i32 dim 1 : vector<8x256xf32>, i32 -> vector<8x256xf32>
      %c4_i32_12 = arith.constant 4 : i32
      %27 = vector.broadcast %c4_i32_12 : i32 to vector<1x256xi32>
      %28 = arith.cmpi sge, %3, %27 : vector<1x256xi32>
      %cst_13 = arith.constant 0.000000e+00 : f32
      %29 = vector.shape_cast %28 : vector<1x256xi1> to vector<1x256xi1>
      %30 = vector.broadcast %29 : vector<1x256xi1> to vector<8x256xi1>
      %31 = vector.broadcast %cst_13 : f32 to vector<8x256xf32>
      %32 = arith.select %30, %26, %31 : vector<8x256xi1>, vector<8x256xf32>
      %33 = vector.extract_strided_slice %13 {offsets = [0, 1], sizes = [8, 1], strides = [1, 1]} : vector<8x11xf32> to vector<8x1xf32>
      %34 = vector.broadcast %33 : vector<8x1xf32> to vector<8x256xf32>
      %35 = arith.mulf %32, %34 : vector<8x256xf32>
      %36 = arith.addf %25, %35 : vector<8x256xf32>
      %c3_i32 = arith.constant 3 : i32
      %37 = tpu.dynamic_rotate %1 by %c3_i32 dim 1 : vector<8x256xf32>, i32 -> vector<8x256xf32>
      %c3_i32_14 = arith.constant 3 : i32
      %38 = vector.broadcast %c3_i32_14 : i32 to vector<1x256xi32>
      %39 = arith.cmpi sge, %3, %38 : vector<1x256xi32>
      %cst_15 = arith.constant 0.000000e+00 : f32
      %40 = vector.shape_cast %39 : vector<1x256xi1> to vector<1x256xi1>
      %41 = vector.broadcast %40 : vector<1x256xi1> to vector<8x256xi1>
      %42 = vector.broadcast %cst_15 : f32 to vector<8x256xf32>
      %43 = arith.select %41, %37, %42 : vector<8x256xi1>, vector<8x256xf32>
      %44 = vector.extract_strided_slice %13 {offsets = [0, 2], sizes = [8, 1], strides = [1, 1]} : vector<8x11xf32> to vector<8x1xf32>
      %45 = vector.broadcast %44 : vector<8x1xf32> to vector<8x256xf32>
      %46 = arith.mulf %43, %45 : vector<8x256xf32>
      %47 = arith.addf %36, %46 : vector<8x256xf32>
      %c2_i32_16 = arith.constant 2 : i32
      %48 = tpu.dynamic_rotate %1 by %c2_i32_16 dim 1 : vector<8x256xf32>, i32 -> vector<8x256xf32>
      %c2_i32_17 = arith.constant 2 : i32
      %49 = vector.broadcast %c2_i32_17 : i32 to vector<1x256xi32>
      %50 = arith.cmpi sge, %3, %49 : vector<1x256xi32>
      %cst_18 = arith.constant 0.000000e+00 : f32
      %51 = vector.shape_cast %50 : vector<1x256xi1> to vector<1x256xi1>
      %52 = vector.broadcast %51 : vector<1x256xi1> to vector<8x256xi1>
      %53 = vector.broadcast %cst_18 : f32 to vector<8x256xf32>
      %54 = arith.select %52, %48, %53 : vector<8x256xi1>, vector<8x256xf32>
      %55 = vector.extract_strided_slice %13 {offsets = [0, 3], sizes = [8, 1], strides = [1, 1]} : vector<8x11xf32> to vector<8x1xf32>
      %56 = vector.broadcast %55 : vector<8x1xf32> to vector<8x256xf32>
      %57 = arith.mulf %54, %56 : vector<8x256xf32>
      %58 = arith.addf %47, %57 : vector<8x256xf32>
      %c1_i32_19 = arith.constant 1 : i32
      %59 = tpu.dynamic_rotate %1 by %c1_i32_19 dim 1 : vector<8x256xf32>, i32 -> vector<8x256xf32>
      %c1_i32_20 = arith.constant 1 : i32
      %60 = vector.broadcast %c1_i32_20 : i32 to vector<1x256xi32>
      %61 = arith.cmpi sge, %3, %60 : vector<1x256xi32>
      %cst_21 = arith.constant 0.000000e+00 : f32
      %62 = vector.shape_cast %61 : vector<1x256xi1> to vector<1x256xi1>
      %63 = vector.broadcast %62 : vector<1x256xi1> to vector<8x256xi1>
      %64 = vector.broadcast %cst_21 : f32 to vector<8x256xf32>
      %65 = arith.select %63, %59, %64 : vector<8x256xi1>, vector<8x256xf32>
      %66 = vector.extract_strided_slice %13 {offsets = [0, 4], sizes = [8, 1], strides = [1, 1]} : vector<8x11xf32> to vector<8x1xf32>
      %67 = vector.broadcast %66 : vector<8x1xf32> to vector<8x256xf32>
      %68 = arith.mulf %65, %67 : vector<8x256xf32>
      %69 = arith.addf %58, %68 : vector<8x256xf32>
      %70 = vector.extract_strided_slice %13 {offsets = [0, 5], sizes = [8, 1], strides = [1, 1]} : vector<8x11xf32> to vector<8x1xf32>
      %71 = vector.broadcast %70 : vector<8x1xf32> to vector<8x256xf32>
      %72 = arith.mulf %1, %71 : vector<8x256xf32>
      %73 = arith.addf %69, %72 : vector<8x256xf32>
      %c255_i32 = arith.constant 255 : i32
      %74 = tpu.dynamic_rotate %1 by %c255_i32 dim 1 : vector<8x256xf32>, i32 -> vector<8x256xf32>
      %c15_i32 = arith.constant 15 : i32
      %75 = vector.broadcast %c15_i32 : i32 to vector<1x256xi32>
      %76 = arith.cmpi slt, %3, %75 : vector<1x256xi32>
      %cst_22 = arith.constant 0.000000e+00 : f32
      %77 = vector.shape_cast %76 : vector<1x256xi1> to vector<1x256xi1>
      %78 = vector.broadcast %77 : vector<1x256xi1> to vector<8x256xi1>
      %79 = vector.broadcast %cst_22 : f32 to vector<8x256xf32>
      %80 = arith.select %78, %74, %79 : vector<8x256xi1>, vector<8x256xf32>
      %81 = vector.extract_strided_slice %13 {offsets = [0, 6], sizes = [8, 1], strides = [1, 1]} : vector<8x11xf32> to vector<8x1xf32>
      %82 = vector.broadcast %81 : vector<8x1xf32> to vector<8x256xf32>
      %83 = arith.mulf %80, %82 : vector<8x256xf32>
      %84 = arith.addf %73, %83 : vector<8x256xf32>
      %c254_i32 = arith.constant 254 : i32
      %85 = tpu.dynamic_rotate %1 by %c254_i32 dim 1 : vector<8x256xf32>, i32 -> vector<8x256xf32>
      %c14_i32 = arith.constant 14 : i32
      %86 = vector.broadcast %c14_i32 : i32 to vector<1x256xi32>
      %87 = arith.cmpi slt, %3, %86 : vector<1x256xi32>
      %cst_23 = arith.constant 0.000000e+00 : f32
      %88 = vector.shape_cast %87 : vector<1x256xi1> to vector<1x256xi1>
      %89 = vector.broadcast %88 : vector<1x256xi1> to vector<8x256xi1>
      %90 = vector.broadcast %cst_23 : f32 to vector<8x256xf32>
      %91 = arith.select %89, %85, %90 : vector<8x256xi1>, vector<8x256xf32>
      %92 = vector.extract_strided_slice %13 {offsets = [0, 7], sizes = [8, 1], strides = [1, 1]} : vector<8x11xf32> to vector<8x1xf32>
      %93 = vector.broadcast %92 : vector<8x1xf32> to vector<8x256xf32>
      %94 = arith.mulf %91, %93 : vector<8x256xf32>
      %95 = arith.addf %84, %94 : vector<8x256xf32>
      %c253_i32 = arith.constant 253 : i32
      %96 = tpu.dynamic_rotate %1 by %c253_i32 dim 1 : vector<8x256xf32>, i32 -> vector<8x256xf32>
      %c13_i32 = arith.constant 13 : i32
      %97 = vector.broadcast %c13_i32 : i32 to vector<1x256xi32>
      %98 = arith.cmpi slt, %3, %97 : vector<1x256xi32>
      %cst_24 = arith.constant 0.000000e+00 : f32
      %99 = vector.shape_cast %98 : vector<1x256xi1> to vector<1x256xi1>
      %100 = vector.broadcast %99 : vector<1x256xi1> to vector<8x256xi1>
      %101 = vector.broadcast %cst_24 : f32 to vector<8x256xf32>
      %102 = arith.select %100, %96, %101 : vector<8x256xi1>, vector<8x256xf32>
      %103 = vector.extract_strided_slice %13 {offsets = [0, 8], sizes = [8, 1], strides = [1, 1]} : vector<8x11xf32> to vector<8x1xf32>
      %104 = vector.broadcast %103 : vector<8x1xf32> to vector<8x256xf32>
      %105 = arith.mulf %102, %104 : vector<8x256xf32>
      %106 = arith.addf %95, %105 : vector<8x256xf32>
      %c252_i32 = arith.constant 252 : i32
      %107 = tpu.dynamic_rotate %1 by %c252_i32 dim 1 : vector<8x256xf32>, i32 -> vector<8x256xf32>
      %c12_i32 = arith.constant 12 : i32
      %108 = vector.broadcast %c12_i32 : i32 to vector<1x256xi32>
      %109 = arith.cmpi slt, %3, %108 : vector<1x256xi32>
      %cst_25 = arith.constant 0.000000e+00 : f32
      %110 = vector.shape_cast %109 : vector<1x256xi1> to vector<1x256xi1>
      %111 = vector.broadcast %110 : vector<1x256xi1> to vector<8x256xi1>
      %112 = vector.broadcast %cst_25 : f32 to vector<8x256xf32>
      %113 = arith.select %111, %107, %112 : vector<8x256xi1>, vector<8x256xf32>
      %114 = vector.extract_strided_slice %13 {offsets = [0, 9], sizes = [8, 1], strides = [1, 1]} : vector<8x11xf32> to vector<8x1xf32>
      %115 = vector.broadcast %114 : vector<8x1xf32> to vector<8x256xf32>
      %116 = arith.mulf %113, %115 : vector<8x256xf32>
      %117 = arith.addf %106, %116 : vector<8x256xf32>
      %c251_i32 = arith.constant 251 : i32
      %118 = tpu.dynamic_rotate %1 by %c251_i32 dim 1 : vector<8x256xf32>, i32 -> vector<8x256xf32>
      %c11_i32 = arith.constant 11 : i32
      %119 = vector.broadcast %c11_i32 : i32 to vector<1x256xi32>
      %120 = arith.cmpi slt, %3, %119 : vector<1x256xi32>
      %cst_26 = arith.constant 0.000000e+00 : f32
      %121 = vector.shape_cast %120 : vector<1x256xi1> to vector<1x256xi1>
      %122 = vector.broadcast %121 : vector<1x256xi1> to vector<8x256xi1>
      %123 = vector.broadcast %cst_26 : f32 to vector<8x256xf32>
      %124 = arith.select %122, %118, %123 : vector<8x256xi1>, vector<8x256xf32>
      %125 = vector.extract_strided_slice %13 {offsets = [0, 10], sizes = [8, 1], strides = [1, 1]} : vector<8x11xf32> to vector<8x1xf32>
      %126 = vector.broadcast %125 : vector<8x1xf32> to vector<8x256xf32>
      %127 = arith.mulf %124, %126 : vector<8x256xf32>
      %128 = arith.addf %117, %127 : vector<8x256xf32>
      %c0_27 = arith.constant 0 : index
      %c0_28 = arith.constant 0 : index
      %129 = vector.load %arg8[%c0_27, %c0_28] : memref<8x1xf32, #tpu.memory_space<vmem>>, vector<8x1xf32>
      %130 = vector.broadcast %129 : vector<8x1xf32> to vector<8x256xf32>
      %131 = arith.addf %128, %130 : vector<8x256xf32>
      %c0_29 = arith.constant 0 : index
      %c0_30 = arith.constant 0 : index
      %c0_31 = arith.constant 0 : index
      %132 = vector.load %arg11[%c0_29, %c0_30, %c0_31] : memref<1x8x256xf32, #tpu.memory_space<vmem>>, vector<1x8x256xf32>
      %133 = vector.shape_cast %132 : vector<1x8x256xf32> to vector<8x256xf32>
      %134 = vector.shape_cast %131 : vector<8x256xf32> to vector<1x8x256xf32>
      tpu.vector_store %arg11[%c0_29, %c0_30, %c0_31], %134 {strides = array<i32>} : memref<1x8x256xf32, #tpu.memory_space<vmem>>, vector<1x8x256xf32>,
    } else {
    }
    %c2_i32 = arith.constant 2 : i32
    %10 = arith.cmpi eq, %arg1, %c2_i32 : i32
    %11 = arith.extui %10 : i1 to i32
    %c0_i32_7 = arith.constant 0 : i32
    %12 = arith.cmpi ne, %11, %c0_i32_7 : i32
    scf.if %12 {
      %c0_8 = arith.constant 0 : index
      %c0_9 = arith.constant 0 : index
      %13 = vector.load %arg6[%c0_8, %c0_9] : memref<8x11xf32, #tpu.memory_space<vmem>>, vector<8x11xf32>
      %cst = arith.constant 0.000000e+00 : f32
      %14 = vector.broadcast %cst : f32 to vector<8x256xf32>
      %c80_i32 = arith.constant 80 : i32
      %15 = tpu.dynamic_rotate %1 by %c80_i32 dim 1 : vector<8x256xf32>, i32 -> vector<8x256xf32>
      %c5_i32 = arith.constant 5 : i32
      %16 = vector.broadcast %c5_i32 : i32 to vector<1x256xi32>
      %17 = arith.cmpi sge, %2, %16 : vector<1x256xi32>
      %cst_10 = arith.constant 0.000000e+00 : f32
      %18 = vector.shape_cast %17 : vector<1x256xi1> to vector<1x256xi1>
      %19 = vector.broadcast %18 : vector<1x256xi1> to vector<8x256xi1>
      %20 = vector.broadcast %cst_10 : f32 to vector<8x256xf32>
      %21 = arith.select %19, %15, %20 : vector<8x256xi1>, vector<8x256xf32>
      %22 = vector.extract_strided_slice %13 {offsets = [0, 0], sizes = [8, 1], strides = [1, 1]} : vector<8x11xf32> to vector<8x1xf32>
      %23 = vector.broadcast %22 : vector<8x1xf32> to vector<8x256xf32>
      %24 = arith.mulf %21, %23 : vector<8x256xf32>
      %25 = arith.addf %14, %24 : vector<8x256xf32>
      %c64_i32 = arith.constant 64 : i32
      %26 = tpu.dynamic_rotate %1 by %c64_i32 dim 1 : vector<8x256xf32>, i32 -> vector<8x256xf32>
      %c4_i32 = arith.constant 4 : i32
      %27 = vector.broadcast %c4_i32 : i32 to vector<1x256xi32>
      %28 = arith.cmpi sge, %2, %27 : vector<1x256xi32>
      %cst_11 = arith.constant 0.000000e+00 : f32
      %29 = vector.shape_cast %28 : vector<1x256xi1> to vector<1x256xi1>
      %30 = vector.broadcast %29 : vector<1x256xi1> to vector<8x256xi1>
      %31 = vector.broadcast %cst_11 : f32 to vector<8x256xf32>
      %32 = arith.select %30, %26, %31 : vector<8x256xi1>, vector<8x256xf32>
      %33 = vector.extract_strided_slice %13 {offsets = [0, 1], sizes = [8, 1], strides = [1, 1]} : vector<8x11xf32> to vector<8x1xf32>
      %34 = vector.broadcast %33 : vector<8x1xf32> to vector<8x256xf32>
      %35 = arith.mulf %32, %34 : vector<8x256xf32>
      %36 = arith.addf %25, %35 : vector<8x256xf32>
      %c48_i32 = arith.constant 48 : i32
      %37 = tpu.dynamic_rotate %1 by %c48_i32 dim 1 : vector<8x256xf32>, i32 -> vector<8x256xf32>
      %c3_i32 = arith.constant 3 : i32
      %38 = vector.broadcast %c3_i32 : i32 to vector<1x256xi32>
      %39 = arith.cmpi sge, %2, %38 : vector<1x256xi32>
      %cst_12 = arith.constant 0.000000e+00 : f32
      %40 = vector.shape_cast %39 : vector<1x256xi1> to vector<1x256xi1>
      %41 = vector.broadcast %40 : vector<1x256xi1> to vector<8x256xi1>
      %42 = vector.broadcast %cst_12 : f32 to vector<8x256xf32>
      %43 = arith.select %41, %37, %42 : vector<8x256xi1>, vector<8x256xf32>
      %44 = vector.extract_strided_slice %13 {offsets = [0, 2], sizes = [8, 1], strides = [1, 1]} : vector<8x11xf32> to vector<8x1xf32>
      %45 = vector.broadcast %44 : vector<8x1xf32> to vector<8x256xf32>
      %46 = arith.mulf %43, %45 : vector<8x256xf32>
      %47 = arith.addf %36, %46 : vector<8x256xf32>
      %c32_i32 = arith.constant 32 : i32
      %48 = tpu.dynamic_rotate %1 by %c32_i32 dim 1 : vector<8x256xf32>, i32 -> vector<8x256xf32>
      %c2_i32_13 = arith.constant 2 : i32
      %49 = vector.broadcast %c2_i32_13 : i32 to vector<1x256xi32>
      %50 = arith.cmpi sge, %2, %49 : vector<1x256xi32>
      %cst_14 = arith.constant 0.000000e+00 : f32
      %51 = vector.shape_cast %50 : vector<1x256xi1> to vector<1x256xi1>
      %52 = vector.broadcast %51 : vector<1x256xi1> to vector<8x256xi1>
      %53 = vector.broadcast %cst_14 : f32 to vector<8x256xf32>
      %54 = arith.select %52, %48, %53 : vector<8x256xi1>, vector<8x256xf32>
      %55 = vector.extract_strided_slice %13 {offsets = [0, 3], sizes = [8, 1], strides = [1, 1]} : vector<8x11xf32> to vector<8x1xf32>
      %56 = vector.broadcast %55 : vector<8x1xf32> to vector<8x256xf32>
      %57 = arith.mulf %54, %56 : vector<8x256xf32>
      %58 = arith.addf %47, %57 : vector<8x256xf32>
      %c16_i32 = arith.constant 16 : i32
      %59 = tpu.dynamic_rotate %1 by %c16_i32 dim 1 : vector<8x256xf32>, i32 -> vector<8x256xf32>
      %c1_i32_15 = arith.constant 1 : i32
      %60 = vector.broadcast %c1_i32_15 : i32 to vector<1x256xi32>
      %61 = arith.cmpi sge, %2, %60 : vector<1x256xi32>
      %cst_16 = arith.constant 0.000000e+00 : f32
      %62 = vector.shape_cast %61 : vector<1x256xi1> to vector<1x256xi1>
      %63 = vector.broadcast %62 : vector<1x256xi1> to vector<8x256xi1>
      %64 = vector.broadcast %cst_16 : f32 to vector<8x256xf32>
      %65 = arith.select %63, %59, %64 : vector<8x256xi1>, vector<8x256xf32>
      %66 = vector.extract_strided_slice %13 {offsets = [0, 4], sizes = [8, 1], strides = [1, 1]} : vector<8x11xf32> to vector<8x1xf32>
      %67 = vector.broadcast %66 : vector<8x1xf32> to vector<8x256xf32>
      %68 = arith.mulf %65, %67 : vector<8x256xf32>
      %69 = arith.addf %58, %68 : vector<8x256xf32>
      %70 = vector.extract_strided_slice %13 {offsets = [0, 5], sizes = [8, 1], strides = [1, 1]} : vector<8x11xf32> to vector<8x1xf32>
      %71 = vector.broadcast %70 : vector<8x1xf32> to vector<8x256xf32>
      %72 = arith.mulf %1, %71 : vector<8x256xf32>
      %73 = arith.addf %69, %72 : vector<8x256xf32>
      %c240_i32 = arith.constant 240 : i32
      %74 = tpu.dynamic_rotate %1 by %c240_i32 dim 1 : vector<8x256xf32>, i32 -> vector<8x256xf32>
      %c15_i32 = arith.constant 15 : i32
      %75 = vector.broadcast %c15_i32 : i32 to vector<1x256xi32>
      %76 = arith.cmpi slt, %2, %75 : vector<1x256xi32>
      %cst_17 = arith.constant 0.000000e+00 : f32
      %77 = vector.shape_cast %76 : vector<1x256xi1> to vector<1x256xi1>
      %78 = vector.broadcast %77 : vector<1x256xi1> to vector<8x256xi1>
      %79 = vector.broadcast %cst_17 : f32 to vector<8x256xf32>
      %80 = arith.select %78, %74, %79 : vector<8x256xi1>, vector<8x256xf32>
      %81 = vector.extract_strided_slice %13 {offsets = [0, 6], sizes = [8, 1], strides = [1, 1]} : vector<8x11xf32> to vector<8x1xf32>
      %82 = vector.broadcast %81 : vector<8x1xf32> to vector<8x256xf32>
      %83 = arith.mulf %80, %82 : vector<8x256xf32>
      %84 = arith.addf %73, %83 : vector<8x256xf32>
      %c224_i32 = arith.constant 224 : i32
      %85 = tpu.dynamic_rotate %1 by %c224_i32 dim 1 : vector<8x256xf32>, i32 -> vector<8x256xf32>
      %c14_i32 = arith.constant 14 : i32
      %86 = vector.broadcast %c14_i32 : i32 to vector<1x256xi32>
      %87 = arith.cmpi slt, %2, %86 : vector<1x256xi32>
      %cst_18 = arith.constant 0.000000e+00 : f32
      %88 = vector.shape_cast %87 : vector<1x256xi1> to vector<1x256xi1>
      %89 = vector.broadcast %88 : vector<1x256xi1> to vector<8x256xi1>
      %90 = vector.broadcast %cst_18 : f32 to vector<8x256xf32>
      %91 = arith.select %89, %85, %90 : vector<8x256xi1>, vector<8x256xf32>
      %92 = vector.extract_strided_slice %13 {offsets = [0, 7], sizes = [8, 1], strides = [1, 1]} : vector<8x11xf32> to vector<8x1xf32>
      %93 = vector.broadcast %92 : vector<8x1xf32> to vector<8x256xf32>
      %94 = arith.mulf %91, %93 : vector<8x256xf32>
      %95 = arith.addf %84, %94 : vector<8x256xf32>
      %c208_i32 = arith.constant 208 : i32
      %96 = tpu.dynamic_rotate %1 by %c208_i32 dim 1 : vector<8x256xf32>, i32 -> vector<8x256xf32>
      %c13_i32 = arith.constant 13 : i32
      %97 = vector.broadcast %c13_i32 : i32 to vector<1x256xi32>
      %98 = arith.cmpi slt, %2, %97 : vector<1x256xi32>
      %cst_19 = arith.constant 0.000000e+00 : f32
      %99 = vector.shape_cast %98 : vector<1x256xi1> to vector<1x256xi1>
      %100 = vector.broadcast %99 : vector<1x256xi1> to vector<8x256xi1>
      %101 = vector.broadcast %cst_19 : f32 to vector<8x256xf32>
      %102 = arith.select %100, %96, %101 : vector<8x256xi1>, vector<8x256xf32>
      %103 = vector.extract_strided_slice %13 {offsets = [0, 8], sizes = [8, 1], strides = [1, 1]} : vector<8x11xf32> to vector<8x1xf32>
      %104 = vector.broadcast %103 : vector<8x1xf32> to vector<8x256xf32>
      %105 = arith.mulf %102, %104 : vector<8x256xf32>
      %106 = arith.addf %95, %105 : vector<8x256xf32>
      %c192_i32 = arith.constant 192 : i32
      %107 = tpu.dynamic_rotate %1 by %c192_i32 dim 1 : vector<8x256xf32>, i32 -> vector<8x256xf32>
      %c12_i32 = arith.constant 12 : i32
      %108 = vector.broadcast %c12_i32 : i32 to vector<1x256xi32>
      %109 = arith.cmpi slt, %2, %108 : vector<1x256xi32>
      %cst_20 = arith.constant 0.000000e+00 : f32
      %110 = vector.shape_cast %109 : vector<1x256xi1> to vector<1x256xi1>
      %111 = vector.broadcast %110 : vector<1x256xi1> to vector<8x256xi1>
      %112 = vector.broadcast %cst_20 : f32 to vector<8x256xf32>
      %113 = arith.select %111, %107, %112 : vector<8x256xi1>, vector<8x256xf32>
      %114 = vector.extract_strided_slice %13 {offsets = [0, 9], sizes = [8, 1], strides = [1, 1]} : vector<8x11xf32> to vector<8x1xf32>
      %115 = vector.broadcast %114 : vector<8x1xf32> to vector<8x256xf32>
      %116 = arith.mulf %113, %115 : vector<8x256xf32>
      %117 = arith.addf %106, %116 : vector<8x256xf32>
      %c176_i32 = arith.constant 176 : i32
      %118 = tpu.dynamic_rotate %1 by %c176_i32 dim 1 : vector<8x256xf32>, i32 -> vector<8x256xf32>
      %c11_i32 = arith.constant 11 : i32
      %119 = vector.broadcast %c11_i32 : i32 to vector<1x256xi32>
      %120 = arith.cmpi slt, %2, %119 : vector<1x256xi32>
      %cst_21 = arith.constant 0.000000e+00 : f32
      %121 = vector.shape_cast %120 : vector<1x256xi1> to vector<1x256xi1>
      %122 = vector.broadcast %121 : vector<1x256xi1> to vector<8x256xi1>
      %123 = vector.broadcast %cst_21 : f32 to vector<8x256xf32>
      %124 = arith.select %122, %118, %123 : vector<8x256xi1>, vector<8x256xf32>
      %125 = vector.extract_strided_slice %13 {offsets = [0, 10], sizes = [8, 1], strides = [1, 1]} : vector<8x11xf32> to vector<8x1xf32>
      %126 = vector.broadcast %125 : vector<8x1xf32> to vector<8x256xf32>
      %127 = arith.mulf %124, %126 : vector<8x256xf32>
      %128 = arith.addf %117, %127 : vector<8x256xf32>
      %c0_22 = arith.constant 0 : index
      %c0_23 = arith.constant 0 : index
      %129 = vector.load %arg9[%c0_22, %c0_23] : memref<8x1xf32, #tpu.memory_space<vmem>>, vector<8x1xf32>
      %130 = vector.broadcast %129 : vector<8x1xf32> to vector<8x256xf32>
      %131 = arith.addf %128, %130 : vector<8x256xf32>
      %c0_24 = arith.constant 0 : index
      %c0_25 = arith.constant 0 : index
      %c0_26 = arith.constant 0 : index
      %132 = vector.load %arg11[%c0_24, %c0_25, %c0_26] : memref<1x8x256xf32, #tpu.memory_space<vmem>>, vector<1x8x256xf32>
      %133 = vector.shape_cast %132 : vector<1x8x256xf32> to vector<8x256xf32>
      %134 = vector.shape_cast %131 : vector<8x256xf32> to vector<1x8x256xf32>
      tpu.vector_store %arg11[%c0_24, %c0_25, %c0_26], %134 {strides = array<i32>} : memref<1x8x256xf32, #tpu.memory_space<vmem>>, vector<1x8x256xf32>,
    } else {
    }
    return
  }
  func.func @transform_0(%arg0: i32, %arg1: i32, %arg2: i32) -> (i32, i32) {
    %c0_i32 = arith.constant 0 : i32
    %c0_i32_0 = arith.constant 0 : i32
    %c0_i32_1 = arith.constant 0 : i32
    return %c0_i32, %c0_i32_0 : i32, i32
  }
  func.func @transform_1(%arg0: i32, %arg1: i32, %arg2: i32) -> (i32, i32) {
    %c0_i32 = arith.constant 0 : i32
    %c0_i32_0 = arith.constant 0 : i32
    return %arg2, %c0_i32 : i32, i32
  }
  func.func @transform_2(%arg0: i32, %arg1: i32, %arg2: i32) -> (i32, i32) {
    %c0_i32 = arith.constant 0 : i32
    %c0_i32_0 = arith.constant 0 : i32
    return %arg2, %c0_i32 : i32, i32
  }
  func.func @transform_3(%arg0: i32, %arg1: i32, %arg2: i32) -> (i32, i32) {
    %c0_i32 = arith.constant 0 : i32
    %c0_i32_0 = arith.constant 0 : i32
    return %arg2, %c0_i32 : i32, i32
  }
  func.func @transform_4(%arg0: i32, %arg1: i32, %arg2: i32) -> (i32, i32) {
    %c0_i32 = arith.constant 0 : i32
    %c0_i32_0 = arith.constant 0 : i32
    return %arg2, %c0_i32 : i32, i32
  }
  func.func @transform_5(%arg0: i32, %arg1: i32, %arg2: i32) -> (i32, i32) {
    %c0_i32 = arith.constant 0 : i32
    %c0_i32_0 = arith.constant 0 : i32
    return %arg2, %c0_i32 : i32, i32
  }
  func.func @transform_6(%arg0: i32, %arg1: i32, %arg2: i32) -> (i32, i32) {
    %c0_i32 = arith.constant 0 : i32
    %c0_i32_0 = arith.constant 0 : i32
    return %arg2, %c0_i32 : i32, i32
  }
  func.func @transform_7(%arg0: i32, %arg1: i32, %arg2: i32) -> (i32, i32, i32) {
    %c1_i32 = arith.constant 1 : i32
    %0 = arith.muli %arg1, %c1_i32 : i32
    %c5_i32 = arith.constant 5 : i32
    %1 = arith.addi %c5_i32, %0 : i32
    %2 = arith.addi %1, %arg2 : i32
    %c0_i32 = arith.constant 0 : i32
    %c0_i32_0 = arith.constant 0 : i32
    return %arg0, %2, %c0_i32 : i32, i32, i32
  }
  func.func @transform_8(%arg0: i32, %arg1: i32, %arg2: i32) -> (i32, i32, i32) {
    %c1_i32 = arith.constant 1 : i32
    %0 = arith.muli %arg1, %c1_i32 : i32
    %c5_i32 = arith.constant 5 : i32
    %1 = arith.addi %c5_i32, %0 : i32
    %2 = arith.addi %1, %arg2 : i32
    %c0_i32 = arith.constant 0 : i32
    %c0_i32_0 = arith.constant 0 : i32
    return %arg0, %2, %c0_i32 : i32, i32, i32
  }
}

</mosaic_0001>

<llo_original>
// kernel: tile.9
$region0: #{tile.9}
  %s0 = inlined_call_operand.vmem [shape: s32[16,16], index: 0, kind: input, shape index: {}]
  %s1 = inlined_call_operand.vmem [shape: s32[1,256], index: 1, kind: output, shape index: {}]
  $region1: #{tile.9} parent=0
    #allocation0 [shape = 'u8[8192]{0}', space=vmem, size = 0x2000, scoped, tag = 'scoped mem for output reshape']
    %s2 = smov 3
    %v3 = vld [vmem:[%s0] ss:$8 sm:%s2]
    %vm4 = vcmask 130048
    %5 = vst.msk [vmem:[#allocation0] ss:$8 sm:$0x3] %vm4, %v3
    %s6 = scalar_lea.vmem %s0, 7
    %s7 = smov 3
    %v8 = vld [vmem:[%s6] ss:$8 sm:%s7]
    %9 = vrot.lane.b32.xlu0 %v8, 112
    %v10 = vpop.permute.xlu0 %9
    %vm11 = vcmask 1048448
    %12 = vst.msk [vmem:[#allocation0] ss:$8 sm:$0x3] %vm11, %v10
    %s13 = scalar_lea.vmem %s0, 6
    %s14 = smov 3
    %v15 = vld [vmem:[%s13] ss:$8 sm:%s14]
    %16 = vrot.lane.b32.xlu0 %v15, 96
    %v17 = vpop.permute.xlu0 %16
    %vm18 = vcmask 917248
    %19 = vst.msk [vmem:[#allocation0] ss:$8 sm:$0x3] %vm18, %v17
    %s20 = scalar_lea.vmem %s0, 5
    %s21 = smov 3
    %v22 = vld [vmem:[%s20] ss:$8 sm:%s21]
    %23 = vrot.lane.b32.xlu0 %v22, 80
    %v24 = vpop.permute.xlu0 %23
    %vm25 = vcmask 786048
    %26 = vst.msk [vmem:[#allocation0] ss:$8 sm:$0x3] %vm25, %v24
    %s27 = scalar_lea.vmem %s0, 4
    %s28 = smov 3
    %v29 = vld [vmem:[%s27] ss:$8 sm:%s28]
    %30 = vrot.lane.b32.xlu0 %v29, 64
    %v31 = vpop.permute.xlu0 %30
    %vm32 = vcmask 654848
    %33 = vst.msk [vmem:[#allocation0] ss:$8 sm:$0x3] %vm32, %v31
    %s34 = scalar_lea.vmem %s0, 3
    %s35 = smov 3
    %v36 = vld [vmem:[%s34] ss:$8 sm:%s35]
    %37 = vrot.lane.b32.xlu0 %v36, 48
    %v38 = vpop.permute.xlu0 %37
    %vm39 = vcmask 523648
    %40 = vst.msk [vmem:[#allocation0] ss:$8 sm:$0x3] %vm39, %v38
    %s41 = scalar_lea.vmem %s0, 2
    %s42 = smov 3
    %v43 = vld [vmem:[%s41] ss:$8 sm:%s42]
    %44 = vrot.lane.b32.xlu0 %v43, 32
    %v45 = vpop.permute.xlu0 %44
    %vm46 = vcmask 392448
    %47 = vst.msk [vmem:[#allocation0] ss:$8 sm:$0x3] %vm46, %v45
    %s48 = scalar_lea.vmem %s0, 1
    %s49 = smov 3
    %v50 = vld [vmem:[%s48] ss:$8 sm:%s49]
    %51 = vrot.lane.b32.xlu0 %v50, 16
    %v52 = vpop.permute.xlu0 %51
    %vm53 = vcmask 261248
    %54 = vst.msk [vmem:[#allocation0] ss:$8 sm:$0x3] %vm53, %v52
    %s56 = sshll.u32 1, 1
    %s57 = ssub.s32 %s56, 1
    %v59 = vld [vmem:[#allocation0] sm:%s57]
    %s60 = sshll.u32 1, 1
    %s61 = ssub.s32 %s60, 1
    %62 = vst [vmem:[%s1] sm:%s61] %v59
    %s63 = scalar_lea.vmem [#allocation0], 8
    %v64 = vld [vmem:[%s63] sm:%s57]
    %s65 = sshll.u32 1, 1
    %s66 = ssub.s32 %s65, 1
    %s67 = scalar_lea.vmem %s1, 1
    %68 = vst [vmem:[%s67] sm:%s66] %v64

// kernel: inception_dwconv_transpose2d.1
$region0: #{inception_dwconv_transpose2d.1}
  #allocation0 [shape = 'u32[]', space=smem, size = 0x4, offset = 0x4, fixed_abs, tag = 'smem constant byte address 0x4 - core index']
  #allocation1 [shape = 'u32[144,128]{1,0:T(1,128)}', space=vmem, size = 0x12000, scoped, tag = 'internal scratch']
  %s0 = inlined_call_operand.vmem [shape: s32[2,256], index: 0, kind: input, shape index: {}]
  %s1 = inlined_call_operand.vmem [shape: f32[8,9], index: 1, kind: input, shape index: {}]
  %s2 = inlined_call_operand.vmem [shape: f32[8,11], index: 2, kind: input, shape index: {}]
  %s3 = inlined_call_operand.vmem [shape: f32[8,11], index: 3, kind: input, shape index: {}]
  %s4 = inlined_call_operand.vmem [shape: f32[8,1], index: 4, kind: input, shape index: {}]
  %s5 = inlined_call_operand.vmem [shape: f32[8,1], index: 5, kind: input, shape index: {}]
  %s6 = inlined_call_operand.vmem [shape: f32[8,1], index: 6, kind: input, shape index: {}]
  %s7 = inlined_call_operand.vmem [shape: f32[2,64,256], index: 7, kind: input, shape index: {}, may-alias: {7,8}]
  %s8 = inlined_call_operand.vmem [shape: f32[2,64,256], index: 8, kind: output, shape index: {}, may-alias: {7,8}]
  %s9 = sld [smem:[#allocation0]]
  $region77: #{inception_dwconv_transpose2d.1} parent=0
    _
  %s11 = ssub.s32 1, %s9
  %s12 = scalar_select 0, %s11, %s9
  loop: start=0, step=1, limit=8
  $region2: #{inception_dwconv_transpose2d.1} parent=0 // loop_pre_header
    _
  $region3: #{inception_dwconv_transpose2d.1} parent=0 // loop_header
    %s14 = sphi 0, %s18
    %p15 = scmp.ge.s32.totalorder %s14, 8
    %s21 = sphi 0, %s40
    %s22 = sphi 0, %s36
    %s23 = sphi 0, %s32
    %s24 = sphi 0, %s21
    %s25 = sphi 0, %s22
    %s26 = sphi 0, %s23
    %s27 = sphi 0, %s24
    %s28 = sphi 0, %s25
    %s29 = sphi 0, %s26
    %s41 = sphi 0, %s41
    %s43 = sphi 0, %s41
    %s44 = sphi 0, %s43
    %s58 = sphi 0, %s44
    %s64 = sphi 0, %s66
    %s67 = sphi 0, %s64
    %s68 = sphi 0, %s67
    %s84 = sphi 0, %s68
    %s90 = sphi 0, %s92
    %s93 = sphi 0, %s90
    %s94 = sphi 0, %s93
    %s110 = sphi 0, %s94
    %s116 = sphi 0, %s118
    %s119 = sphi 0, %s116
    %s120 = sphi 0, %s119
    %s136 = sphi 0, %s120
    %s142 = sphi 0, %s144
    %s145 = sphi 0, %s142
    %s146 = sphi 0, %s145
    %s162 = sphi 0, %s146
    %s168 = sphi 0, %s170
    %s171 = sphi 0, %s168
    %s172 = sphi 0, %s171
    %s188 = sphi 0, %s172
    %s194 = sphi 0, %s196
    %s197 = sphi 0, %s194
    %s198 = sphi 0, %s197
    %s214 = sphi 0, %s198
    %s226 = sphi 0, %s228
    %s229 = sphi 0, %s226
    %s230 = sphi 0, %s229
    %s246 = sphi 0, %s230
    %s258 = sphi 0, %s260
    %s261 = sphi 0, %s258
    %s262 = sphi 0, %s261
    %s278 = sphi 0, %s262
  $region4: #{inception_dwconv_transpose2d.1} parent=0 // loop_header_branch
    %17 = sbr.rel (%p15) target = $region8
  $region5: #{inception_dwconv_transpose2d.1} parent=0 // loop_body
    %s19 = ssub.s32 %s14, 1
    %s20 = ssub.s32 %s14, 2
    %s30 = sadd.s32 1, %s23
    %p31 = scmp.ge.s32.totalorder %s30, 1
    %s32 = scalar_select %p31, 0, %s30
    %s33 = sadd.s32 1, %s22
    %s34 = scalar_select %p31, %s33, %s22
    %p35 = scmp.ge.s32.totalorder %s34, 3
    %s36 = scalar_select %p35, 0, %s34
    %s37 = sadd.s32 1, %s21
    %s38 = scalar_select %p35, %s37, %s21
    %p39 = scmp.ge.s32.totalorder %s38, 2
    %s40 = scalar_select %p39, 0, %s38
    %s42 = sadd.s32 %s41, 1
    %p45 = scmp.eq.s32.totalorder %s14, 5
    %p46 = scmp.ne.s32.totalorder %s41, %s43
    %p47 = scmp.eq.s32.totalorder %s14, 0
    %p48 = por %p46, %p47
    %p49 = scmp.ne.s32.totalorder %s41, %s43
    %p50 = scmp.eq.s32.totalorder %s19, 5
    %p51 = por %p49, %p50
    %p52 = scmp.ne.s32.totalorder %s43, %s44
    %p53 = scmp.eq.s32.totalorder %s19, 0
    %p54 = por %p52, %p53
    %p55 = scmp.ne.s32.totalorder %s43, %s44
    %p56 = scmp.eq.s32.totalorder %s20, 5
    %p57 = por %p55, %p56
    %p59 = scmp.ne.s32.totalorder %s44, %s58
    %p60 = scmp.eq.s32.totalorder %s20, 0
    %p61 = por %p59, %p60
    %s62 = ssub.s32 %s23, %s32
    %p63 = scmp.eq.s32.totalorder %s62, 0
    %s65 = sadd.s32 %s64, 1
    %s66 = scalar_select %p63, %s64, %s65
    %p69 = pneg %p63
    %p70 = scmp.eq.s32.totalorder %s14, 5
    %p71 = por %p69, %p70
    %p72 = scmp.ne.s32.totalorder %s64, %s67
    %p73 = scmp.eq.s32.totalorder %s14, 0
    %p74 = por %p72, %p73
    %p75 = scmp.ne.s32.totalorder %s64, %s67
    %p76 = scmp.eq.s32.totalorder %s19, 5
    %p77 = por %p75, %p76
    %p78 = scmp.ne.s32.totalorder %s67, %s68
    %p79 = scmp.eq.s32.totalorder %s19, 0
    %p80 = por %p78, %p79
    %p81 = scmp.ne.s32.totalorder %s67, %s68
    %p82 = scmp.eq.s32.totalorder %s20, 5
    %p83 = por %p81, %p82
    %p85 = scmp.ne.s32.totalorder %s68, %s84
    %p86 = scmp.eq.s32.totalorder %s20, 0
    %p87 = por %p85, %p86
    %s88 = ssub.s32 %s23, %s32
    %p89 = scmp.eq.s32.totalorder %s88, 0
    %s91 = sadd.s32 %s90, 1
    %s92 = scalar_select %p89, %s90, %s91
    %p95 = pneg %p89
    %p96 = scmp.eq.s32.totalorder %s14, 5
    %p97 = por %p95, %p96
    %p98 = scmp.ne.s32.totalorder %s90, %s93
    %p99 = scmp.eq.s32.totalorder %s14, 0
    %p100 = por %p98, %p99
    %p101 = scmp.ne.s32.totalorder %s90, %s93
    %p102 = scmp.eq.s32.totalorder %s19, 5
    %p103 = por %p101, %p102
    %p104 = scmp.ne.s32.totalorder %s93, %s94
    %p105 = scmp.eq.s32.totalorder %s19, 0
    %p106 = por %p104, %p105
    %p107 = scmp.ne.s32.totalorder %s93, %s94
    %p108 = scmp.eq.s32.totalorder %s20, 5
    %p109 = por %p107, %p108
    %p111 = scmp.ne.s32.totalorder %s94, %s110
    %p112 = scmp.eq.s32.totalorder %s20, 0
    %p113 = por %p111, %p112
    %s114 = ssub.s32 %s23, %s32
    %p115 = scmp.eq.s32.totalorder %s114, 0
    %s117 = sadd.s32 %s116, 1
    %s118 = scalar_select %p115, %s116, %s117
    %p121 = pneg %p115
    %p122 = scmp.eq.s32.totalorder %s14, 5
    %p123 = por %p121, %p122
    %p124 = scmp.ne.s32.totalorder %s116, %s119
    %p125 = scmp.eq.s32.totalorder %s14, 0
    %p126 = por %p124, %p125
    %p127 = scmp.ne.s32.totalorder %s116, %s119
    %p128 = scmp.eq.s32.totalorder %s19, 5
    %p129 = por %p127, %p128
    %p130 = scmp.ne.s32.totalorder %s119, %s120
    %p131 = scmp.eq.s32.totalorder %s19, 0
    %p132 = por %p130, %p131
    %p133 = scmp.ne.s32.totalorder %s119, %s120
    %p134 = scmp.eq.s32.totalorder %s20, 5
    %p135 = por %p133, %p134
    %p137 = scmp.ne.s32.totalorder %s120, %s136
    %p138 = scmp.eq.s32.totalorder %s20, 0
    %p139 = por %p137, %p138
    %s140 = ssub.s32 %s23, %s32
    %p141 = scmp.eq.s32.totalorder %s140, 0
    %s143 = sadd.s32 %s142, 1
    %s144 = scalar_select %p141, %s142, %s143
    %p147 = pneg %p141
    %p148 = scmp.eq.s32.totalorder %s14, 5
    %p149 = por %p147, %p148
    %p150 = scmp.ne.s32.totalorder %s142, %s145
    %p151 = scmp.eq.s32.totalorder %s14, 0
    %p152 = por %p150, %p151
    %p153 = scmp.ne.s32.totalorder %s142, %s145
    %p154 = scmp.eq.s32.totalorder %s19, 5
    %p155 = por %p153, %p154
    %p156 = scmp.ne.s32.totalorder %s145, %s146
    %p157 = scmp.eq.s32.totalorder %s19, 0
    %p158 = por %p156, %p157
    %p159 = scmp.ne.s32.totalorder %s145, %s146
    %p160 = scmp.eq.s32.totalorder %s20, 5
    %p161 = por %p159, %p160
    %p163 = scmp.ne.s32.totalorder %s146, %s162
    %p164 = scmp.eq.s32.totalorder %s20, 0
    %p165 = por %p163, %p164
    %s166 = ssub.s32 %s23, %s32
    %p167 = scmp.eq.s32.totalorder %s166, 0
    %s169 = sadd.s32 %s168, 1
    %s170 = scalar_select %p167, %s168, %s169
    %p173 = pneg %p167
    %p174 = scmp.eq.s32.totalorder %s14, 5
    %p175 = por %p173, %p174
    %p176 = scmp.ne.s32.totalorder %s168, %s171
    %p177 = scmp.eq.s32.totalorder %s14, 0
    %p178 = por %p176, %p177
    %p179 = scmp.ne.s32.totalorder %s168, %s171
    %p180 = scmp.eq.s32.totalorder %s19, 5
    %p181 = por %p179, %p180
    %p182 = scmp.ne.s32.totalorder %s171, %s172
    %p183 = scmp.eq.s32.totalorder %s19, 0
    %p184 = por %p182, %p183
    %p185 = scmp.ne.s32.totalorder %s171, %s172
    %p186 = scmp.eq.s32.totalorder %s20, 5
    %p187 = por %p185, %p186
    %p189 = scmp.ne.s32.totalorder %s172, %s188
    %p190 = scmp.eq.s32.totalorder %s20, 0
    %p191 = por %p189, %p190
    %s192 = ssub.s32 %s23, %s32
    %p193 = scmp.eq.s32.totalorder %s192, 0
    %s195 = sadd.s32 %s194, 1
    %s196 = scalar_select %p193, %s194, %s195
    %p199 = pneg %p193
    %p200 = scmp.eq.s32.totalorder %s14, 5
    %p201 = por %p199, %p200
    %p202 = scmp.ne.s32.totalorder %s194, %s197
    %p203 = scmp.eq.s32.totalorder %s14, 0
    %p204 = por %p202, %p203
    %p205 = scmp.ne.s32.totalorder %s194, %s197
    %p206 = scmp.eq.s32.totalorder %s19, 5
    %p207 = por %p205, %p206
    %p208 = scmp.ne.s32.totalorder %s197, %s198
    %p209 = scmp.eq.s32.totalorder %s19, 0
    %p210 = por %p208, %p209
    %p211 = scmp.ne.s32.totalorder %s197, %s198
    %p212 = scmp.eq.s32.totalorder %s20, 5
    %p213 = por %p211, %p212
    %p215 = scmp.ne.s32.totalorder %s198, %s214
    %p216 = scmp.eq.s32.totalorder %s20, 0
    %p217 = por %p215, %p216
    %s218 = sadd.s32 %s22, 5
    %s219 = sadd.s32 %s218, %s23
    %s220 = sadd.s32 %s36, 5
    %s221 = sadd.s32 %s220, %s32
    %s222 = ssub.s32 %s21, %s40
    %s223 = ssub.s32 %s219, %s221
    %s224 = sor.u32 %s222, %s223
    %p225 = scmp.eq.s32.totalorder %s224, 0
    %s227 = sadd.s32 %s226, 1
    %s228 = scalar_select %p225, %s226, %s227
    %p231 = pneg %p225
    %p232 = scmp.eq.s32.totalorder %s14, 5
    %p233 = por %p231, %p232
    %p234 = scmp.ne.s32.totalorder %s226, %s229
    %p235 = scmp.eq.s32.totalorder %s14, 0
    %p236 = por %p234, %p235
    %p237 = scmp.ne.s32.totalorder %s226, %s229
    %p238 = scmp.eq.s32.totalorder %s19, 5
    %p239 = por %p237, %p238
    %p240 = scmp.ne.s32.totalorder %s229, %s230
    %p241 = scmp.eq.s32.totalorder %s19, 0
    %p242 = por %p240, %p241
    %p243 = scmp.ne.s32.totalorder %s229, %s230
    %p244 = scmp.eq.s32.totalorder %s20, 5
    %p245 = por %p243, %p244
    %p247 = scmp.ne.s32.totalorder %s230, %s246
    %p248 = scmp.eq.s32.totalorder %s20, 0
    %p249 = por %p247, %p248
    %s250 = sadd.s32 %s22, 5
    %s251 = sadd.s32 %s250, %s23
    %s252 = sadd.s32 %s36, 5
    %s253 = sadd.s32 %s252, %s32
    %s254 = ssub.s32 %s21, %s40
    %s255 = ssub.s32 %s251, %s253
    %s256 = sor.u32 %s254, %s255
    %p257 = scmp.eq.s32.totalorder %s256, 0
    %s259 = sadd.s32 %s258, 1
    %s260 = scalar_select %p257, %s258, %s259
    %p263 = pneg %p257
    %p264 = scmp.eq.s32.totalorder %s14, 5
    %p265 = por %p263, %p264
    %p266 = scmp.ne.s32.totalorder %s258, %s261
    %p267 = scmp.eq.s32.totalorder %s14, 0
    %p268 = por %p266, %p267
    %p269 = scmp.ne.s32.totalorder %s258, %s261
    %p270 = scmp.eq.s32.totalorder %s19, 5
    %p271 = por %p269, %p270
    %p272 = scmp.ne.s32.totalorder %s261, %s262
    %p273 = scmp.eq.s32.totalorder %s19, 0
    %p274 = por %p272, %p273
    %p275 = scmp.ne.s32.totalorder %s261, %s262
    %p276 = scmp.eq.s32.totalorder %s20, 5
    %p277 = por %p275, %p276
    %p279 = scmp.ne.s32.totalorder %s262, %s278
    %p280 = scmp.eq.s32.totalorder %s20, 0
    %p281 = por %p279, %p280
    %p282 = scmp.le.s32.totalorder 1, %s14
    %p283 = scmp.lt.s32.totalorder %s14, 7
    %p284 = pnand %p282, %p283
    %p285 = pneg %p284
    // Predicated region
    $region9: #{inception_dwconv_transpose2d.1} parent=5 // pred_check
      _
    $region10: #{inception_dwconv_transpose2d.1} parent=5 // pred_check_branch
      %287 = sbr.rel (%p284) target = $region12
    $region11: #{inception_dwconv_transpose2d.1} parent=5 // pred_region
      %s288 = ssub.s32 %s14, 1
      // Predicated region
      $region13: #{inception_dwconv_transpose2d.1} parent=11 // pred_check
        %p289 = pneg %p54
      $region14: #{inception_dwconv_transpose2d.1} parent=11 // pred_check_branch
        %291 = sbr.rel (%p289) target = $region16
      $region15: #{inception_dwconv_transpose2d.1} parent=11 // pred_region
        _
      $region16: #{inception_dwconv_transpose2d.1} parent=11 // pred_fallthru
        _
      // Predicated region
      $region17: #{inception_dwconv_transpose2d.1} parent=11 // pred_check
        %p292 = pneg %p80
      $region18: #{inception_dwconv_transpose2d.1} parent=11 // pred_check_branch
        %294 = sbr.rel (%p292) target = $region20
      $region19: #{inception_dwconv_transpose2d.1} parent=11 // pred_region
        %p295 = scmp.lt.s32.totalorder %s26, 0
        %s296 = scalar_select %p295, %s26, 0
        %s297 = smul.addr %s296, 8
        %s298 = scalar_lea.vmem %s1, %s297
      $region20: #{inception_dwconv_transpose2d.1} parent=11 // pred_fallthru
        _
      // Predicated region
      $region21: #{inception_dwconv_transpose2d.1} parent=11 // pred_check
        %p299 = pneg %p106
      $region22: #{inception_dwconv_transpose2d.1} parent=11 // pred_check_branch
        %301 = sbr.rel (%p299) target = $region24
      $region23: #{inception_dwconv_transpose2d.1} parent=11 // pred_region
        %p302 = scmp.lt.s32.totalorder %s26, 0
        %s303 = scalar_select %p302, %s26, 0
        %s304 = smul.addr %s303, 8
        %s305 = scalar_lea.vmem %s2, %s304
      $region24: #{inception_dwconv_transpose2d.1} parent=11 // pred_fallthru
        _
      // Predicated region
      $region25: #{inception_dwconv_transpose2d.1} parent=11 // pred_check
        %p306 = pneg %p132
      $region26: #{inception_dwconv_transpose2d.1} parent=11 // pred_check_branch
        %308 = sbr.rel (%p306) target = $region28
      $region27: #{inception_dwconv_transpose2d.1} parent=11 // pred_region
        %p309 = scmp.lt.s32.totalorder %s26, 0
        %s310 = scalar_select %p309, %s26, 0
        %s311 = smul.addr %s310, 8
        %s312 = scalar_lea.vmem %s3, %s311
      $region28: #{inception_dwconv_transpose2d.1} parent=11 // pred_fallthru
        _
      // Predicated region
      $region29: #{inception_dwconv_transpose2d.1} parent=11 // pred_check
        %p313 = pneg %p158
      $region30: #{inception_dwconv_transpose2d.1} parent=11 // pred_check_branch
        %315 = sbr.rel (%p313) target = $region32
      $region31: #{inception_dwconv_transpose2d.1} parent=11 // pred_region
        %p316 = scmp.lt.s32.totalorder %s26, 0
        %s317 = scalar_select %p316, %s26, 0
        %s318 = smul.addr %s317, 8
        %s319 = scalar_lea.vmem %s4, %s318
      $region32: #{inception_dwconv_transpose2d.1} parent=11 // pred_fallthru
        _
      // Predicated region
      $region33: #{inception_dwconv_transpose2d.1} parent=11 // pred_check
        %p320 = pneg %p184
      $region34: #{inception_dwconv_transpose2d.1} parent=11 // pred_check_branch
        %322 = sbr.rel (%p320) target = $region36
      $region35: #{inception_dwconv_transpose2d.1} parent=11 // pred_region
        %p323 = scmp.lt.s32.totalorder %s26, 0
        %s324 = scalar_select %p323, %s26, 0
        %s325 = smul.addr %s324, 8
        %s326 = scalar_lea.vmem %s5, %s325
      $region36: #{inception_dwconv_transpose2d.1} parent=11 // pred_fallthru
        _
      // Predicated region
      $region37: #{inception_dwconv_transpose2d.1} parent=11 // pred_check
        %p327 = pneg %p210
      $region38: #{inception_dwconv_transpose2d.1} parent=11 // pred_check_branch
        %329 = sbr.rel (%p327) target = $region40
      $region39: #{inception_dwconv_transpose2d.1} parent=11 // pred_region
        %p330 = scmp.lt.s32.totalorder %s26, 0
        %s331 = scalar_select %p330, %s26, 0
        %s332 = smul.addr %s331, 8
        %s333 = scalar_lea.vmem %s6, %s332
      $region40: #{inception_dwconv_transpose2d.1} parent=11 // pred_fallthru
        _
    $region12: #{inception_dwconv_transpose2d.1} parent=5 // pred_fallthru
      _
    %p334 = scmp.lt.s32.totalorder %s14, 6
    // Predicated region
    $region41: #{inception_dwconv_transpose2d.1} parent=5 // pred_check
      %p335 = pneg %p334
    $region42: #{inception_dwconv_transpose2d.1} parent=5 // pred_check_branch
      %337 = sbr.rel (%p335) target = $region44
    $region43: #{inception_dwconv_transpose2d.1} parent=5 // pred_region
      // Predicated region
      $region45: #{inception_dwconv_transpose2d.1} parent=43 // pred_check
        %p338 = pneg %p236
      $region46: #{inception_dwconv_transpose2d.1} parent=43 // pred_check_branch
        %340 = sbr.rel (%p338) target = $region48
      $region47: #{inception_dwconv_transpose2d.1} parent=43 // pred_region
        %s341 = sadd.s32 %s22, 5
        %s342 = sadd.s32 %s341, %s23
        %p343 = scmp.lt.s32.totalorder %s21, 1
        %s344 = scalar_select %p343, %s21, 1
        %p345 = scmp.lt.s32.totalorder %s342, 7
        %s346 = scalar_select %p345, %s342, 7
        %s347 = smul.addr %s346, 2
        %s348 = smul.addr %s344, 16
        %s349 = sadd.s32 %s347, %s348
        %s350 = smul.addr %s349, 8
        %s351 = scalar_lea.vmem %s7, %s350
        %s352 = sadd.s32 %s22, 5
        %s353 = sadd.s32 %s352, %s23
      $region48: #{inception_dwconv_transpose2d.1} parent=43 // pred_fallthru
        _
    $region44: #{inception_dwconv_transpose2d.1} parent=5 // pred_fallthru
      _
    %p354 = scmp.le.s32.totalorder 1, %s14
    %p355 = scmp.lt.s32.totalorder %s14, 7
    %p356 = pnand %p354, %p355
    %p357 = pneg %p356
    // Predicated region
    $region49: #{inception_dwconv_transpose2d.1} parent=5 // pred_check
      _
    $region50: #{inception_dwconv_transpose2d.1} parent=5 // pred_check_branch
      %359 = sbr.rel (%p356) target = $region52
    $region51: #{inception_dwconv_transpose2d.1} parent=5 // pred_region
      %s360 = ssub.s32 %s14, 1
      %p361 = pneg %p54
      %p362 = pneg %p51
      %p363 = scmp.lt.s32.totalorder %s26, 0
      %s364 = scalar_select %p363, %s26, 0
      %s365 = smul.addr %s364, 8
      %s366 = scalar_lea.vmem %s1, %s365
      %p367 = pneg %p80
      %p368 = pneg %p77
      %p369 = scmp.lt.s32.totalorder %s26, 0
      %s370 = scalar_select %p369, %s26, 0
      %s371 = smul.addr %s370, 8
      %s372 = scalar_lea.vmem %s2, %s371
      %p373 = pneg %p106
      %p374 = pneg %p103
      %p375 = scmp.lt.s32.totalorder %s26, 0
      %s376 = scalar_select %p375, %s26, 0
      %s377 = smul.addr %s376, 8
      %s378 = scalar_lea.vmem %s3, %s377
      %p379 = pneg %p132
      %p380 = pneg %p129
      %p381 = scmp.lt.s32.totalorder %s26, 0
      %s382 = scalar_select %p381, %s26, 0
      %s383 = smul.addr %s382, 8
      %s384 = scalar_lea.vmem %s4, %s383
      %p385 = pneg %p158
      %p386 = pneg %p155
      %p387 = scmp.lt.s32.totalorder %s26, 0
      %s388 = scalar_select %p387, %s26, 0
      %s389 = smul.addr %s388, 8
      %s390 = scalar_lea.vmem %s5, %s389
      %p391 = pneg %p184
      %p392 = pneg %p181
      %p393 = scmp.lt.s32.totalorder %s26, 0
      %s394 = scalar_select %p393, %s26, 0
      %s395 = smul.addr %s394, 8
      %s396 = scalar_lea.vmem %s6, %s395
      %p397 = pneg %p210
      %p398 = pneg %p207
      %s399 = sadd.s32 %s25, 5
      %s400 = sadd.s32 %s399, %s26
      %p401 = scmp.lt.s32.totalorder %s24, 1
      %s402 = scalar_select %p401, %s24, 1
      %p403 = scmp.lt.s32.totalorder %s400, 7
      %s404 = scalar_select %p403, %s400, 7
      %s405 = smul.addr %s404, 2
      %s406 = smul.addr %s402, 16
      %s407 = sadd.s32 %s405, %s406
      %s408 = smul.addr %s407, 8
      %s409 = scalar_lea.vmem %s7, %s408
      %p410 = pneg %p242
      %p411 = pneg %p239
      %p412 = pneg %p274
      %p413 = pneg %p271
      %s414 = sadd.s32 %s25, 5
      %s415 = sadd.s32 %s414, %s26
      %p416 = scmp.lt.s32.totalorder %s24, 1
      %s417 = scalar_select %p416, %s24, 1
      %p418 = scmp.lt.s32.totalorder %s415, 7
      %s419 = scalar_select %p418, %s415, 7
      %s420 = smul.addr %s419, 2
      %s421 = smul.addr %s417, 16
      %s422 = sadd.s32 %s420, %s421
      %s423 = smul.addr %s422, 8
      %s424 = scalar_lea.vmem %s8, %s423
      %p425 = scmp.lt.s32.totalorder %s26, 0
      %s426 = scalar_select %p425, %s26, 0
      %s427 = smul.addr %s426, 8
      %s428 = scalar_lea.vmem %s1, %s427
      %p429 = scmp.lt.s32.totalorder %s26, 0
      %s430 = scalar_select %p429, %s26, 0
      %s431 = smul.addr %s430, 8
      %s432 = scalar_lea.vmem %s2, %s431
      %p433 = scmp.lt.s32.totalorder %s26, 0
      %s434 = scalar_select %p433, %s26, 0
      %s435 = smul.addr %s434, 8
      %s436 = scalar_lea.vmem %s3, %s435
      %p437 = scmp.lt.s32.totalorder %s26, 0
      %s438 = scalar_select %p437, %s26, 0
      %s439 = smul.addr %s438, 8
      %s440 = scalar_lea.vmem %s4, %s439
      %p441 = scmp.lt.s32.totalorder %s26, 0
      %s442 = scalar_select %p441, %s26, 0
      %s443 = smul.addr %s442, 8
      %s444 = scalar_lea.vmem %s5, %s443
      %p445 = scmp.lt.s32.totalorder %s26, 0
      %s446 = scalar_select %p445, %s26, 0
      %s447 = smul.addr %s446, 8
      %s448 = scalar_lea.vmem %s6, %s447
      %s449 = sadd.s32 %s25, 5
      %s450 = sadd.s32 %s449, %s26
      %p451 = scmp.lt.s32.totalorder %s24, 1
      %s452 = scalar_select %p451, %s24, 1
      %p453 = scmp.lt.s32.totalorder %s450, 7
      %s454 = scalar_select %p453, %s450, 7
      %s455 = smul.addr %s454, 2
      %s456 = smul.addr %s452, 16
      %s457 = sadd.s32 %s455, %s456
      %s458 = smul.addr %s457, 8
      %s459 = scalar_lea.vmem %s7, %s458
      %s460 = sadd.s32 %s25, 5
      %s461 = sadd.s32 %s460, %s26
      %s462 = sadd.s32 %s25, 5
      %s463 = sadd.s32 %s462, %s26
      %p464 = scmp.lt.s32.totalorder %s24, 1
      %s465 = scalar_select %p464, %s24, 1
      %p466 = scmp.lt.s32.totalorder %s463, 7
      %s467 = scalar_select %p466, %s463, 7
      %s468 = smul.addr %s467, 2
      %s469 = smul.addr %s465, 16
      %s470 = sadd.s32 %s468, %s469
      %s471 = smul.addr %s470, 8
      %s472 = scalar_lea.vmem %s8, %s471
      %s473 = sadd.s32 %s25, 5
      %s474 = sadd.s32 %s473, %s26
      %v475 = vld [vmem:[%s459] sm:$0xff]
      %v476 = vld [vmem:[%s459 + $0x8] sm:$0xff]
      %v477 = vld [vmem:[%s0] ss:$2 sm:$0x3]
      %s478 = scalar_lea.vmem %s0, 1
      %v479 = vld [vmem:[%s478] ss:$2 sm:$0x3]
      %p480 = scmp.eq.s32.totalorder %s25, 0
      // Predicated region
      $region53: #{inception_dwconv_transpose2d.1} parent=51 // pred_check
        %p481 = pneg %p480
      $region54: #{inception_dwconv_transpose2d.1} parent=51 // pred_check_branch
        %483 = sbr.rel (%p481) target = $region56
      $region55: #{inception_dwconv_transpose2d.1} parent=51 // pred_region
        %v484 = vld [vmem:[%s428] sm:$0xff]
        %485 = vrot.lane.b32.xlu0 %v475, 17
        %v486 = vpop.permute.xlu0 %485
        %487 = vrot.lane.b32.xlu0 %v476, 17
        %v488 = vpop.permute.xlu0 %487
        %v489 = vlaneseq
        %v490 = vand.u32 %v489, 127
        %vm491 = vcmp.lt.s32.totalorder %v490, 17
        %v492 = vsel %vm491, %v486, %v488
        %v493 = vsel %vm491, %v488, %v486
        %vm494 = vcmp.ge.s32.totalorder %v477, 1
        %vm495 = vcmp.ge.s32.totalorder %v479, 1
        %vm496 = vmand %vm494, %vm495
        %v497 = vsel %vm496, 1, 0
        %v498 = vlaneseq
        %v499 = vshrl.u32 %v498, 7
        %v500 = vsub.s32 0, %v499
        %v501 = vrot.slane %v497, %v500
        %v502 = vlaneseq
        %v503 = vshrl.u32 %v502, 7
        %v504 = vsub.s32 1, %v503
        %v505 = vrot.slane %v497, %v504
        %vm506 = vcmp.eq.s32.totalorder %v501, 1
        %vm507 = vcmp.eq.s32.totalorder %v505, 1
        %v508 = vsel %vm506, %v493, 0.0
        %v509 = vsel %vm507, %v492, 0.0
        %511 = vset.pattern.permute.xlu0 0
        %512 = vperm.xlu0 %511, %v484
        %v513 = vpop.permute.xlu0 %512
        %v515 = vmul.f32 %v508, %v513
        %v516 = vmul.f32 %v509, %v513
        %v517 = vadd.f32 %v515, 0.0
        %v518 = vadd.f32 %v516, 0.0
        %519 = vrot.lane.b32.xlu0 %v475, 16
        %v520 = vpop.permute.xlu0 %519
        %521 = vrot.lane.b32.xlu0 %v476, 16
        %v522 = vpop.permute.xlu0 %521
        %vm523 = vcmp.lt.s32.totalorder %v490, 16
        %v524 = vsel %vm523, %v520, %v522
        %v525 = vsel %vm523, %v522, %v520
        %v526 = vsel %vm494, 1, 0
        %v527 = vlaneseq
        %v528 = vshrl.u32 %v527, 7
        %v529 = vsub.s32 0, %v528
        %v530 = vrot.slane %v526, %v529
        %v531 = vlaneseq
        %v532 = vshrl.u32 %v531, 7
        %v533 = vsub.s32 1, %v532
        %v534 = vrot.slane %v526, %v533
        %vm535 = vcmp.eq.s32.totalorder %v530, 1
        %vm536 = vcmp.eq.s32.totalorder %v534, 1
        %v537 = vsel %vm535, %v525, 0.0
        %v538 = vsel %vm536, %v524, 0.0
        %539 = vset.pattern.permute.xlu0 1
        %540 = vperm.xlu0 %539, %v484
        %v541 = vpop.permute.xlu0 %540
        %v543 = vmul.f32 %v537, %v541
        %v544 = vmul.f32 %v538, %v541
        %v545 = vadd.f32 %v517, %v543
        %v546 = vadd.f32 %v518, %v544
        %547 = vrot.lane.b32.xlu0 %v475, 15
        %v548 = vpop.permute.xlu0 %547
        %549 = vrot.lane.b32.xlu0 %v476, 15
        %v550 = vpop.permute.xlu0 %549
        %vm551 = vcmp.lt.s32.totalorder %v490, 15
        %v552 = vsel %vm551, %v548, %v550
        %v553 = vsel %vm551, %v550, %v548
        %vm554 = vcmp.lt.s32.totalorder %v479, 15
        %vm555 = vmand %vm494, %vm554
        %v556 = vsel %vm555, 1, 0
        %v557 = vlaneseq
        %v558 = vshrl.u32 %v557, 7
        %v559 = vsub.s32 0, %v558
        %v560 = vrot.slane %v556, %v559
        %v561 = vlaneseq
        %v562 = vshrl.u32 %v561, 7
        %v563 = vsub.s32 1, %v562
        %v564 = vrot.slane %v556, %v563
        %vm565 = vcmp.eq.s32.totalorder %v560, 1
        %vm566 = vcmp.eq.s32.totalorder %v564, 1
        %v567 = vsel %vm565, %v553, 0.0
        %v568 = vsel %vm566, %v552, 0.0
        %569 = vset.pattern.permute.xlu0 2
        %570 = vperm.xlu0 %569, %v484
        %v571 = vpop.permute.xlu0 %570
        %v573 = vmul.f32 %v567, %v571
        %v574 = vmul.f32 %v568, %v571
        %v575 = vadd.f32 %v545, %v573
        %v576 = vadd.f32 %v546, %v574
        %577 = vrot.lane.b32.xlu0 %v475, 1
        %v578 = vpop.permute.xlu0 %577
        %579 = vrot.lane.b32.xlu0 %v476, 1
        %v580 = vpop.permute.xlu0 %579
        %vm581 = vcmp.lt.s32.totalorder %v490, 1
        %v582 = vsel %vm581, %v578, %v580
        %v583 = vsel %vm581, %v580, %v578
        %v584 = vsel %vm495, 1, 0
        %v585 = vlaneseq
        %v586 = vshrl.u32 %v585, 7
        %v587 = vsub.s32 0, %v586
        %v588 = vrot.slane %v584, %v587
        %v589 = vlaneseq
        %v590 = vshrl.u32 %v589, 7
        %v591 = vsub.s32 1, %v590
        %v592 = vrot.slane %v584, %v591
        %vm593 = vcmp.eq.s32.totalorder %v588, 1
        %vm594 = vcmp.eq.s32.totalorder %v592, 1
        %v595 = vsel %vm593, %v583, 0.0
        %v596 = vsel %vm594, %v582, 0.0
        %597 = vset.pattern.permute.xlu0 3
        %598 = vperm.xlu0 %597, %v484
        %v599 = vpop.permute.xlu0 %598
        %v601 = vmul.f32 %v595, %v599
        %v602 = vmul.f32 %v596, %v599
        %v603 = vadd.f32 %v575, %v601
        %v604 = vadd.f32 %v576, %v602
        %605 = vset.pattern.permute.xlu0 4
        %606 = vperm.xlu0 %605, %v484
        %v607 = vpop.permute.xlu0 %606
        %v609 = vmul.f32 %v475, %v607
        %v610 = vmul.f32 %v476, %v607
        %v611 = vadd.f32 %v603, %v609
        %v612 = vadd.f32 %v604, %v610
        %613 = vrot.lane.b32.xlu0 %v475, 127
        %v614 = vpop.permute.xlu0 %613
        %615 = vrot.lane.b32.xlu0 %v476, 127
        %v616 = vpop.permute.xlu0 %615
        %vm617 = vcmp.lt.s32.totalorder %v490, 127
        %v618 = vsel %vm617, %v614, %v616
        %v619 = vsel %vm617, %v616, %v614
        %v620 = vsel %vm554, 1, 0
        %v621 = vlaneseq
        %v622 = vshrl.u32 %v621, 7
        %v623 = vsub.s32 0, %v622
        %v624 = vrot.slane %v620, %v623
        %v625 = vlaneseq
        %v626 = vshrl.u32 %v625, 7
        %v627 = vsub.s32 1, %v626
        %v628 = vrot.slane %v620, %v627
        %vm629 = vcmp.eq.s32.totalorder %v624, 1
        %vm630 = vcmp.eq.s32.totalorder %v628, 1
        %v631 = vsel %vm629, %v618, 0.0
        %v632 = vsel %vm630, %v619, 0.0
        %633 = vset.pattern.permute.xlu0 5
        %634 = vperm.xlu0 %633, %v484
        %v635 = vpop.permute.xlu0 %634
        %v637 = vmul.f32 %v631, %v635
        %v638 = vmul.f32 %v632, %v635
        %v639 = vadd.f32 %v611, %v637
        %v640 = vadd.f32 %v612, %v638
        %641 = vrot.lane.b32.xlu0 %v475, 113
        %v642 = vpop.permute.xlu0 %641
        %643 = vrot.lane.b32.xlu0 %v476, 113
        %v644 = vpop.permute.xlu0 %643
        %vm645 = vcmp.lt.s32.totalorder %v490, 113
        %v646 = vsel %vm645, %v642, %v644
        %v647 = vsel %vm645, %v644, %v642
        %vm648 = vcmp.lt.s32.totalorder %v477, 15
        %vm649 = vmand %vm648, %vm495
        %v650 = vsel %vm649, 1, 0
        %v651 = vlaneseq
        %v652 = vshrl.u32 %v651, 7
        %v653 = vsub.s32 0, %v652
        %v654 = vrot.slane %v650, %v653
        %v655 = vlaneseq
        %v656 = vshrl.u32 %v655, 7
        %v657 = vsub.s32 1, %v656
        %v658 = vrot.slane %v650, %v657
        %vm659 = vcmp.eq.s32.totalorder %v654, 1
        %vm660 = vcmp.eq.s32.totalorder %v658, 1
        %v661 = vsel %vm659, %v646, 0.0
        %v662 = vsel %vm660, %v647, 0.0
        %663 = vset.pattern.permute.xlu0 6
        %664 = vperm.xlu0 %663, %v484
        %v665 = vpop.permute.xlu0 %664
        %v667 = vmul.f32 %v661, %v665
        %v668 = vmul.f32 %v662, %v665
        %v669 = vadd.f32 %v639, %v667
        %v670 = vadd.f32 %v640, %v668
        %671 = vrot.lane.b32.xlu0 %v475, 112
        %v672 = vpop.permute.xlu0 %671
        %673 = vrot.lane.b32.xlu0 %v476, 112
        %v674 = vpop.permute.xlu0 %673
        %vm675 = vcmp.lt.s32.totalorder %v490, 112
        %v676 = vsel %vm675, %v672, %v674
        %v677 = vsel %vm675, %v674, %v672
        %v678 = vsel %vm648, 1, 0
        %v679 = vlaneseq
        %v680 = vshrl.u32 %v679, 7
        %v681 = vsub.s32 0, %v680
        %v682 = vrot.slane %v678, %v681
        %v683 = vlaneseq
        %v684 = vshrl.u32 %v683, 7
        %v685 = vsub.s32 1, %v684
        %v686 = vrot.slane %v678, %v685
        %vm687 = vcmp.eq.s32.totalorder %v682, 1
        %vm688 = vcmp.eq.s32.totalorder %v686, 1
        %v689 = vsel %vm687, %v676, 0.0
        %v690 = vsel %vm688, %v677, 0.0
        %691 = vset.pattern.permute.xlu0 7
        %692 = vperm.xlu0 %691, %v484
        %v693 = vpop.permute.xlu0 %692
        %v695 = vmul.f32 %v689, %v693
        %v696 = vmul.f32 %v690, %v693
        %v697 = vadd.f32 %v669, %v695
        %v698 = vadd.f32 %v670, %v696
        %699 = vrot.lane.b32.xlu0 %v475, 111
        %v700 = vpop.permute.xlu0 %699
        %701 = vrot.lane.b32.xlu0 %v476, 111
        %v702 = vpop.permute.xlu0 %701
        %vm703 = vcmp.lt.s32.totalorder %v490, 111
        %v704 = vsel %vm703, %v700, %v702
        %v705 = vsel %vm703, %v702, %v700
        %vm706 = vmand %vm648, %vm554
        %v707 = vsel %vm706, 1, 0
        %v708 = vlaneseq
        %v709 = vshrl.u32 %v708, 7
        %v710 = vsub.s32 0, %v709
        %v711 = vrot.slane %v707, %v710
        %v712 = vlaneseq
        %v713 = vshrl.u32 %v712, 7
        %v714 = vsub.s32 1, %v713
        %v715 = vrot.slane %v707, %v714
        %vm716 = vcmp.eq.s32.totalorder %v711, 1
        %vm717 = vcmp.eq.s32.totalorder %v715, 1
        %v718 = vsel %vm716, %v704, 0.0
        %v719 = vsel %vm717, %v705, 0.0
        %720 = vset.pattern.permute.xlu0 8
        %721 = vperm.xlu0 %720, %v484
        %v722 = vpop.permute.xlu0 %721
        %v724 = vmul.f32 %v718, %v722
        %v725 = vmul.f32 %v719, %v722
        %v726 = vadd.f32 %v697, %v724
        %v727 = vadd.f32 %v698, %v725
        %v728 = vld [vmem:[%s440] sm:$0xff]
        %730 = vset.pattern.permute.xlu0 0
        %731 = vperm.xlu0 %730, %v728
        %v732 = vpop.permute.xlu0 %731
        %v734 = vadd.f32 %v726, %v732
        %v735 = vadd.f32 %v727, %v732
        %736 = vst [vmem:[%s472] sm:$0xff] %v734
        %737 = vst [vmem:[%s472 + $0x8] sm:$0xff] %v735
      $region56: #{inception_dwconv_transpose2d.1} parent=51 // pred_fallthru
        _
      %p738 = scmp.eq.s32.totalorder %s25, 1
      // Predicated region
      $region57: #{inception_dwconv_transpose2d.1} parent=51 // pred_check
        %p739 = pneg %p738
      $region58: #{inception_dwconv_transpose2d.1} parent=51 // pred_check_branch
        %741 = sbr.rel (%p739) target = $region60
      $region59: #{inception_dwconv_transpose2d.1} parent=51 // pred_region
        %v742 = vld [vmem:[%s432] sm:$0xff]
        %743 = vrot.lane.b32.xlu0 %v475, 5
        %v744 = vpop.permute.xlu0 %743
        %745 = vrot.lane.b32.xlu0 %v476, 5
        %v746 = vpop.permute.xlu0 %745
        %v747 = vlaneseq
        %v748 = vand.u32 %v747, 127
        %vm749 = vcmp.lt.s32.totalorder %v748, 5
        %v750 = vsel %vm749, %v744, %v746
        %v751 = vsel %vm749, %v746, %v744
        %vm752 = vcmp.ge.s32.totalorder %v479, 5
        %v753 = vsel %vm752, 1, 0
        %v754 = vlaneseq
        %v755 = vshrl.u32 %v754, 7
        %v756 = vsub.s32 0, %v755
        %v757 = vrot.slane %v753, %v756
        %v758 = vlaneseq
        %v759 = vshrl.u32 %v758, 7
        %v760 = vsub.s32 1, %v759
        %v761 = vrot.slane %v753, %v760
        %vm762 = vcmp.eq.s32.totalorder %v757, 1
        %vm763 = vcmp.eq.s32.totalorder %v761, 1
        %v764 = vsel %vm762, %v751, 0.0
        %v765 = vsel %vm763, %v750, 0.0
        %767 = vset.pattern.permute.xlu0 0
        %768 = vperm.xlu0 %767, %v742
        %v769 = vpop.permute.xlu0 %768
        %v771 = vmul.f32 %v764, %v769
        %v772 = vmul.f32 %v765, %v769
        %v773 = vadd.f32 %v771, 0.0
        %v774 = vadd.f32 %v772, 0.0
        %775 = vrot.lane.b32.xlu0 %v475, 4
        %v776 = vpop.permute.xlu0 %775
        %777 = vrot.lane.b32.xlu0 %v476, 4
        %v778 = vpop.permute.xlu0 %777
        %vm779 = vcmp.lt.s32.totalorder %v748, 4
        %v780 = vsel %vm779, %v776, %v778
        %v781 = vsel %vm779, %v778, %v776
        %vm782 = vcmp.ge.s32.totalorder %v479, 4
        %v783 = vsel %vm782, 1, 0
        %v784 = vlaneseq
        %v785 = vshrl.u32 %v784, 7
        %v786 = vsub.s32 0, %v785
        %v787 = vrot.slane %v783, %v786
        %v788 = vlaneseq
        %v789 = vshrl.u32 %v788, 7
        %v790 = vsub.s32 1, %v789
        %v791 = vrot.slane %v783, %v790
        %vm792 = vcmp.eq.s32.totalorder %v787, 1
        %vm793 = vcmp.eq.s32.totalorder %v791, 1
        %v794 = vsel %vm792, %v781, 0.0
        %v795 = vsel %vm793, %v780, 0.0
        %796 = vset.pattern.permute.xlu0 1
        %797 = vperm.xlu0 %796, %v742
        %v798 = vpop.permute.xlu0 %797
        %v800 = vmul.f32 %v794, %v798
        %v801 = vmul.f32 %v795, %v798
        %v802 = vadd.f32 %v773, %v800
        %v803 = vadd.f32 %v774, %v801
        %804 = vrot.lane.b32.xlu0 %v475, 3
        %v805 = vpop.permute.xlu0 %804
        %806 = vrot.lane.b32.xlu0 %v476, 3
        %v807 = vpop.permute.xlu0 %806
        %vm808 = vcmp.lt.s32.totalorder %v748, 3
        %v809 = vsel %vm808, %v805, %v807
        %v810 = vsel %vm808, %v807, %v805
        %vm811 = vcmp.ge.s32.totalorder %v479, 3
        %v812 = vsel %vm811, 1, 0
        %v813 = vlaneseq
        %v814 = vshrl.u32 %v813, 7
        %v815 = vsub.s32 0, %v814
        %v816 = vrot.slane %v812, %v815
        %v817 = vlaneseq
        %v818 = vshrl.u32 %v817, 7
        %v819 = vsub.s32 1, %v818
        %v820 = vrot.slane %v812, %v819
        %vm821 = vcmp.eq.s32.totalorder %v816, 1
        %vm822 = vcmp.eq.s32.totalorder %v820, 1
        %v823 = vsel %vm821, %v810, 0.0
        %v824 = vsel %vm822, %v809, 0.0
        %825 = vset.pattern.permute.xlu0 2
        %826 = vperm.xlu0 %825, %v742
        %v827 = vpop.permute.xlu0 %826
        %v829 = vmul.f32 %v823, %v827
        %v830 = vmul.f32 %v824, %v827
        %v831 = vadd.f32 %v802, %v829
        %v832 = vadd.f32 %v803, %v830
        %833 = vrot.lane.b32.xlu0 %v475, 2
        %v834 = vpop.permute.xlu0 %833
        %835 = vrot.lane.b32.xlu0 %v476, 2
        %v836 = vpop.permute.xlu0 %835
        %vm837 = vcmp.lt.s32.totalorder %v748, 2
        %v838 = vsel %vm837, %v834, %v836
        %v839 = vsel %vm837, %v836, %v834
        %vm840 = vcmp.ge.s32.totalorder %v479, 2
        %v841 = vsel %vm840, 1, 0
        %v842 = vlaneseq
        %v843 = vshrl.u32 %v842, 7
        %v844 = vsub.s32 0, %v843
        %v845 = vrot.slane %v841, %v844
        %v846 = vlaneseq
        %v847 = vshrl.u32 %v846, 7
        %v848 = vsub.s32 1, %v847
        %v849 = vrot.slane %v841, %v848
        %vm850 = vcmp.eq.s32.totalorder %v845, 1
        %vm851 = vcmp.eq.s32.totalorder %v849, 1
        %v852 = vsel %vm850, %v839, 0.0
        %v853 = vsel %vm851, %v838, 0.0
        %854 = vset.pattern.permute.xlu0 3
        %855 = vperm.xlu0 %854, %v742
        %v856 = vpop.permute.xlu0 %855
        %v858 = vmul.f32 %v852, %v856
        %v859 = vmul.f32 %v853, %v856
        %v860 = vadd.f32 %v831, %v858
        %v861 = vadd.f32 %v832, %v859
        %862 = vrot.lane.b32.xlu0 %v475, 1
        %v863 = vpop.permute.xlu0 %862
        %864 = vrot.lane.b32.xlu0 %v476, 1
        %v865 = vpop.permute.xlu0 %864
        %vm866 = vcmp.lt.s32.totalorder %v748, 1
        %v867 = vsel %vm866, %v863, %v865
        %v868 = vsel %vm866, %v865, %v863
        %vm869 = vcmp.ge.s32.totalorder %v479, 1
        %v870 = vsel %vm869, 1, 0
        %v871 = vlaneseq
        %v872 = vshrl.u32 %v871, 7
        %v873 = vsub.s32 0, %v872
        %v874 = vrot.slane %v870, %v873
        %v875 = vlaneseq
        %v876 = vshrl.u32 %v875, 7
        %v877 = vsub.s32 1, %v876
        %v878 = vrot.slane %v870, %v877
        %vm879 = vcmp.eq.s32.totalorder %v874, 1
        %vm880 = vcmp.eq.s32.totalorder %v878, 1
        %v881 = vsel %vm879, %v868, 0.0
        %v882 = vsel %vm880, %v867, 0.0
        %883 = vset.pattern.permute.xlu0 4
        %884 = vperm.xlu0 %883, %v742
        %v885 = vpop.permute.xlu0 %884
        %v887 = vmul.f32 %v881, %v885
        %v888 = vmul.f32 %v882, %v885
        %v889 = vadd.f32 %v860, %v887
        %v890 = vadd.f32 %v861, %v888
        %891 = vset.pattern.permute.xlu0 5
        %892 = vperm.xlu0 %891, %v742
        %v893 = vpop.permute.xlu0 %892
        %v895 = vmul.f32 %v475, %v893
        %v896 = vmul.f32 %v476, %v893
        %v897 = vadd.f32 %v889, %v895
        %v898 = vadd.f32 %v890, %v896
        %899 = vrot.lane.b32.xlu0 %v475, 127
        %v900 = vpop.permute.xlu0 %899
        %901 = vrot.lane.b32.xlu0 %v476, 127
        %v902 = vpop.permute.xlu0 %901
        %vm903 = vcmp.lt.s32.totalorder %v748, 127
        %v904 = vsel %vm903, %v900, %v902
        %v905 = vsel %vm903, %v902, %v900
        %vm906 = vcmp.lt.s32.totalorder %v479, 15
        %v907 = vsel %vm906, 1, 0
        %v908 = vlaneseq
        %v909 = vshrl.u32 %v908, 7
        %v910 = vsub.s32 0, %v909
        %v911 = vrot.slane %v907, %v910
        %v912 = vlaneseq
        %v913 = vshrl.u32 %v912, 7
        %v914 = vsub.s32 1, %v913
        %v915 = vrot.slane %v907, %v914
        %vm916 = vcmp.eq.s32.totalorder %v911, 1
        %vm917 = vcmp.eq.s32.totalorder %v915, 1
        %v918 = vsel %vm916, %v904, 0.0
        %v919 = vsel %vm917, %v905, 0.0
        %920 = vset.pattern.permute.xlu0 6
        %921 = vperm.xlu0 %920, %v742
        %v922 = vpop.permute.xlu0 %921
        %v924 = vmul.f32 %v918, %v922
        %v925 = vmul.f32 %v919, %v922
        %v926 = vadd.f32 %v897, %v924
        %v927 = vadd.f32 %v898, %v925
        %928 = vrot.lane.b32.xlu0 %v475, 126
        %v929 = vpop.permute.xlu0 %928
        %930 = vrot.lane.b32.xlu0 %v476, 126
        %v931 = vpop.permute.xlu0 %930
        %vm932 = vcmp.lt.s32.totalorder %v748, 126
        %v933 = vsel %vm932, %v929, %v931
        %v934 = vsel %vm932, %v931, %v929
        %vm935 = vcmp.lt.s32.totalorder %v479, 14
        %v936 = vsel %vm935, 1, 0
        %v937 = vlaneseq
        %v938 = vshrl.u32 %v937, 7
        %v939 = vsub.s32 0, %v938
        %v940 = vrot.slane %v936, %v939
        %v941 = vlaneseq
        %v942 = vshrl.u32 %v941, 7
        %v943 = vsub.s32 1, %v942
        %v944 = vrot.slane %v936, %v943
        %vm945 = vcmp.eq.s32.totalorder %v940, 1
        %vm946 = vcmp.eq.s32.totalorder %v944, 1
        %v947 = vsel %vm945, %v933, 0.0
        %v948 = vsel %vm946, %v934, 0.0
        %949 = vset.pattern.permute.xlu0 7
        %950 = vperm.xlu0 %949, %v742
        %v951 = vpop.permute.xlu0 %950
        %v953 = vmul.f32 %v947, %v951
        %v954 = vmul.f32 %v948, %v951
        %v955 = vadd.f32 %v926, %v953
        %v956 = vadd.f32 %v927, %v954
        %957 = vrot.lane.b32.xlu0 %v475, 125
        %v958 = vpop.permute.xlu0 %957
        %959 = vrot.lane.b32.xlu0 %v476, 125
        %v960 = vpop.permute.xlu0 %959
        %vm961 = vcmp.lt.s32.totalorder %v748, 125
        %v962 = vsel %vm961, %v958, %v960
        %v963 = vsel %vm961, %v960, %v958
        %vm964 = vcmp.lt.s32.totalorder %v479, 13
        %v965 = vsel %vm964, 1, 0
        %v966 = vlaneseq
        %v967 = vshrl.u32 %v966, 7
        %v968 = vsub.s32 0, %v967
        %v969 = vrot.slane %v965, %v968
        %v970 = vlaneseq
        %v971 = vshrl.u32 %v970, 7
        %v972 = vsub.s32 1, %v971
        %v973 = vrot.slane %v965, %v972
        %vm974 = vcmp.eq.s32.totalorder %v969, 1
        %vm975 = vcmp.eq.s32.totalorder %v973, 1
        %v976 = vsel %vm974, %v962, 0.0
        %v977 = vsel %vm975, %v963, 0.0
        %978 = vset.pattern.permute.xlu0 8
        %979 = vperm.xlu0 %978, %v742
        %v980 = vpop.permute.xlu0 %979
        %v982 = vmul.f32 %v976, %v980
        %v983 = vmul.f32 %v977, %v980
        %v984 = vadd.f32 %v955, %v982
        %v985 = vadd.f32 %v956, %v983
        %986 = vrot.lane.b32.xlu0 %v475, 124
        %v987 = vpop.permute.xlu0 %986
        %988 = vrot.lane.b32.xlu0 %v476, 124
        %v989 = vpop.permute.xlu0 %988
        %vm990 = vcmp.lt.s32.totalorder %v748, 124
        %v991 = vsel %vm990, %v987, %v989
        %v992 = vsel %vm990, %v989, %v987
        %vm993 = vcmp.lt.s32.totalorder %v479, 12
        %v994 = vsel %vm993, 1, 0
        %v995 = vlaneseq
        %v996 = vshrl.u32 %v995, 7
        %v997 = vsub.s32 0, %v996
        %v998 = vrot.slane %v994, %v997
        %v999 = vlaneseq
        %v1000 = vshrl.u32 %v999, 7
        %v1001 = vsub.s32 1, %v1000
        %v1002 = vrot.slane %v994, %v1001
        %vm1003 = vcmp.eq.s32.totalorder %v998, 1
        %vm1004 = vcmp.eq.s32.totalorder %v1002, 1
        %v1005 = vsel %vm1003, %v991, 0.0
        %v1006 = vsel %vm1004, %v992, 0.0
        %1007 = vset.pattern.permute.xlu0 9
        %1008 = vperm.xlu0 %1007, %v742
        %v1009 = vpop.permute.xlu0 %1008
        %v1011 = vmul.f32 %v1005, %v1009
        %v1012 = vmul.f32 %v1006, %v1009
        %v1013 = vadd.f32 %v984, %v1011
        %v1014 = vadd.f32 %v985, %v1012
        %1015 = vrot.lane.b32.xlu0 %v475, 123
        %v1016 = vpop.permute.xlu0 %1015
        %1017 = vrot.lane.b32.xlu0 %v476, 123
        %v1018 = vpop.permute.xlu0 %1017
        %vm1019 = vcmp.lt.s32.totalorder %v748, 123
        %v1020 = vsel %vm1019, %v1016, %v1018
        %v1021 = vsel %vm1019, %v1018, %v1016
        %vm1022 = vcmp.lt.s32.totalorder %v479, 11
        %v1023 = vsel %vm1022, 1, 0
        %v1024 = vlaneseq
        %v1025 = vshrl.u32 %v1024, 7
        %v1026 = vsub.s32 0, %v1025
        %v1027 = vrot.slane %v1023, %v1026
        %v1028 = vlaneseq
        %v1029 = vshrl.u32 %v1028, 7
        %v1030 = vsub.s32 1, %v1029
        %v1031 = vrot.slane %v1023, %v1030
        %vm1032 = vcmp.eq.s32.totalorder %v1027, 1
        %vm1033 = vcmp.eq.s32.totalorder %v1031, 1
        %v1034 = vsel %vm1032, %v1020, 0.0
        %v1035 = vsel %vm1033, %v1021, 0.0
        %1036 = vset.pattern.permute.xlu0 10
        %1037 = vperm.xlu0 %1036, %v742
        %v1038 = vpop.permute.xlu0 %1037
        %v1040 = vmul.f32 %v1034, %v1038
        %v1041 = vmul.f32 %v1035, %v1038
        %v1042 = vadd.f32 %v1013, %v1040
        %v1043 = vadd.f32 %v1014, %v1041
        %v1044 = vld [vmem:[%s444] sm:$0xff]
        %1046 = vset.pattern.permute.xlu0 0
        %1047 = vperm.xlu0 %1046, %v1044
        %v1048 = vpop.permute.xlu0 %1047
        %v1050 = vadd.f32 %v1042, %v1048
        %v1051 = vadd.f32 %v1043, %v1048
        %1052 = vst [vmem:[%s472] sm:$0xff] %v1050
        %1053 = vst [vmem:[%s472 + $0x8] sm:$0xff] %v1051
      $region60: #{inception_dwconv_transpose2d.1} parent=51 // pred_fallthru
        _
      %p1054 = scmp.eq.s32.totalorder %s25, 2
      // Predicated region
      $region61: #{inception_dwconv_transpose2d.1} parent=51 // pred_check
        %p1055 = pneg %p1054
      $region62: #{inception_dwconv_transpose2d.1} parent=51 // pred_check_branch
        %1057 = sbr.rel (%p1055) target = $region64
      $region63: #{inception_dwconv_transpose2d.1} parent=51 // pred_region
        %v1058 = vld [vmem:[%s436] sm:$0xff]
        %1059 = vrot.lane.b32.xlu0 %v475, 80
        %v1060 = vpop.permute.xlu0 %1059
        %1061 = vrot.lane.b32.xlu0 %v476, 80
        %v1062 = vpop.permute.xlu0 %1061
        %v1063 = vlaneseq
        %v1064 = vand.u32 %v1063, 127
        %vm1065 = vcmp.lt.s32.totalorder %v1064, 80
        %v1066 = vsel %vm1065, %v1060, %v1062
        %v1067 = vsel %vm1065, %v1062, %v1060
        %vm1068 = vcmp.ge.s32.totalorder %v477, 5
        %v1069 = vsel %vm1068, 1, 0
        %v1070 = vlaneseq
        %v1071 = vshrl.u32 %v1070, 7
        %v1072 = vsub.s32 0, %v1071
        %v1073 = vrot.slane %v1069, %v1072
        %v1074 = vlaneseq
        %v1075 = vshrl.u32 %v1074, 7
        %v1076 = vsub.s32 1, %v1075
        %v1077 = vrot.slane %v1069, %v1076
        %vm1078 = vcmp.eq.s32.totalorder %v1073, 1
        %vm1079 = vcmp.eq.s32.totalorder %v1077, 1
        %v1080 = vsel %vm1078, %v1067, 0.0
        %v1081 = vsel %vm1079, %v1066, 0.0
        %1083 = vset.pattern.permute.xlu0 0
        %1084 = vperm.xlu0 %1083, %v1058
        %v1085 = vpop.permute.xlu0 %1084
        %v1087 = vmul.f32 %v1080, %v1085
        %v1088 = vmul.f32 %v1081, %v1085
        %v1089 = vadd.f32 %v1087, 0.0
        %v1090 = vadd.f32 %v1088, 0.0
        %1091 = vrot.lane.b32.xlu0 %v475, 64
        %v1092 = vpop.permute.xlu0 %1091
        %1093 = vrot.lane.b32.xlu0 %v476, 64
        %v1094 = vpop.permute.xlu0 %1093
        %vm1095 = vcmp.lt.s32.totalorder %v1064, 64
        %v1096 = vsel %vm1095, %v1092, %v1094
        %v1097 = vsel %vm1095, %v1094, %v1092
        %vm1098 = vcmp.ge.s32.totalorder %v477, 4
        %v1099 = vsel %vm1098, 1, 0
        %v1100 = vlaneseq
        %v1101 = vshrl.u32 %v1100, 7
        %v1102 = vsub.s32 0, %v1101
        %v1103 = vrot.slane %v1099, %v1102
        %v1104 = vlaneseq
        %v1105 = vshrl.u32 %v1104, 7
        %v1106 = vsub.s32 1, %v1105
        %v1107 = vrot.slane %v1099, %v1106
        %vm1108 = vcmp.eq.s32.totalorder %v1103, 1
        %vm1109 = vcmp.eq.s32.totalorder %v1107, 1
        %v1110 = vsel %vm1108, %v1097, 0.0
        %v1111 = vsel %vm1109, %v1096, 0.0
        %1112 = vset.pattern.permute.xlu0 1
        %1113 = vperm.xlu0 %1112, %v1058
        %v1114 = vpop.permute.xlu0 %1113
        %v1116 = vmul.f32 %v1110, %v1114
        %v1117 = vmul.f32 %v1111, %v1114
        %v1118 = vadd.f32 %v1089, %v1116
        %v1119 = vadd.f32 %v1090, %v1117
        %1120 = vrot.lane.b32.xlu0 %v475, 48
        %v1121 = vpop.permute.xlu0 %1120
        %1122 = vrot.lane.b32.xlu0 %v476, 48
        %v1123 = vpop.permute.xlu0 %1122
        %vm1124 = vcmp.lt.s32.totalorder %v1064, 48
        %v1125 = vsel %vm1124, %v1121, %v1123
        %v1126 = vsel %vm1124, %v1123, %v1121
        %vm1127 = vcmp.ge.s32.totalorder %v477, 3
        %v1128 = vsel %vm1127, 1, 0
        %v1129 = vlaneseq
        %v1130 = vshrl.u32 %v1129, 7
        %v1131 = vsub.s32 0, %v1130
        %v1132 = vrot.slane %v1128, %v1131
        %v1133 = vlaneseq
        %v1134 = vshrl.u32 %v1133, 7
        %v1135 = vsub.s32 1, %v1134
        %v1136 = vrot.slane %v1128, %v1135
        %vm1137 = vcmp.eq.s32.totalorder %v1132, 1
        %vm1138 = vcmp.eq.s32.totalorder %v1136, 1
        %v1139 = vsel %vm1137, %v1126, 0.0
        %v1140 = vsel %vm1138, %v1125, 0.0
        %1141 = vset.pattern.permute.xlu0 2
        %1142 = vperm.xlu0 %1141, %v1058
        %v1143 = vpop.permute.xlu0 %1142
        %v1145 = vmul.f32 %v1139, %v1143
        %v1146 = vmul.f32 %v1140, %v1143
        %v1147 = vadd.f32 %v1118, %v1145
        %v1148 = vadd.f32 %v1119, %v1146
        %1149 = vrot.lane.b32.xlu0 %v475, 32
        %v1150 = vpop.permute.xlu0 %1149
        %1151 = vrot.lane.b32.xlu0 %v476, 32
        %v1152 = vpop.permute.xlu0 %1151
        %vm1153 = vcmp.lt.s32.totalorder %v1064, 32
        %v1154 = vsel %vm1153, %v1150, %v1152
        %v1155 = vsel %vm1153, %v1152, %v1150
        %vm1156 = vcmp.ge.s32.totalorder %v477, 2
        %v1157 = vsel %vm1156, 1, 0
        %v1158 = vlaneseq
        %v1159 = vshrl.u32 %v1158, 7
        %v1160 = vsub.s32 0, %v1159
        %v1161 = vrot.slane %v1157, %v1160
        %v1162 = vlaneseq
        %v1163 = vshrl.u32 %v1162, 7
        %v1164 = vsub.s32 1, %v1163
        %v1165 = vrot.slane %v1157, %v1164
        %vm1166 = vcmp.eq.s32.totalorder %v1161, 1
        %vm1167 = vcmp.eq.s32.totalorder %v1165, 1
        %v1168 = vsel %vm1166, %v1155, 0.0
        %v1169 = vsel %vm1167, %v1154, 0.0
        %1170 = vset.pattern.permute.xlu0 3
        %1171 = vperm.xlu0 %1170, %v1058
        %v1172 = vpop.permute.xlu0 %1171
        %v1174 = vmul.f32 %v1168, %v1172
        %v1175 = vmul.f32 %v1169, %v1172
        %v1176 = vadd.f32 %v1147, %v1174
        %v1177 = vadd.f32 %v1148, %v1175
        %1178 = vrot.lane.b32.xlu0 %v475, 16
        %v1179 = vpop.permute.xlu0 %1178
        %1180 = vrot.lane.b32.xlu0 %v476, 16
        %v1181 = vpop.permute.xlu0 %1180
        %vm1182 = vcmp.lt.s32.totalorder %v1064, 16
        %v1183 = vsel %vm1182, %v1179, %v1181
        %v1184 = vsel %vm1182, %v1181, %v1179
        %vm1185 = vcmp.ge.s32.totalorder %v477, 1
        %v1186 = vsel %vm1185, 1, 0
        %v1187 = vlaneseq
        %v1188 = vshrl.u32 %v1187, 7
        %v1189 = vsub.s32 0, %v1188
        %v1190 = vrot.slane %v1186, %v1189
        %v1191 = vlaneseq
        %v1192 = vshrl.u32 %v1191, 7
        %v1193 = vsub.s32 1, %v1192
        %v1194 = vrot.slane %v1186, %v1193
        %vm1195 = vcmp.eq.s32.totalorder %v1190, 1
        %vm1196 = vcmp.eq.s32.totalorder %v1194, 1
        %v1197 = vsel %vm1195, %v1184, 0.0
        %v1198 = vsel %vm1196, %v1183, 0.0
        %1199 = vset.pattern.permute.xlu0 4
        %1200 = vperm.xlu0 %1199, %v1058
        %v1201 = vpop.permute.xlu0 %1200
        %v1203 = vmul.f32 %v1197, %v1201
        %v1204 = vmul.f32 %v1198, %v1201
        %v1205 = vadd.f32 %v1176, %v1203
        %v1206 = vadd.f32 %v1177, %v1204
        %1207 = vset.pattern.permute.xlu0 5
        %1208 = vperm.xlu0 %1207, %v1058
        %v1209 = vpop.permute.xlu0 %1208
        %v1211 = vmul.f32 %v475, %v1209
        %v1212 = vmul.f32 %v476, %v1209
        %v1213 = vadd.f32 %v1205, %v1211
        %v1214 = vadd.f32 %v1206, %v1212
        %1215 = vrot.lane.b32.xlu0 %v475, 112
        %v1216 = vpop.permute.xlu0 %1215
        %1217 = vrot.lane.b32.xlu0 %v476, 112
        %v1218 = vpop.permute.xlu0 %1217
        %vm1219 = vcmp.lt.s32.totalorder %v1064, 112
        %v1220 = vsel %vm1219, %v1216, %v1218
        %v1221 = vsel %vm1219, %v1218, %v1216
        %vm1222 = vcmp.lt.s32.totalorder %v477, 15
        %v1223 = vsel %vm1222, 1, 0
        %v1224 = vlaneseq
        %v1225 = vshrl.u32 %v1224, 7
        %v1226 = vsub.s32 0, %v1225
        %v1227 = vrot.slane %v1223, %v1226
        %v1228 = vlaneseq
        %v1229 = vshrl.u32 %v1228, 7
        %v1230 = vsub.s32 1, %v1229
        %v1231 = vrot.slane %v1223, %v1230
        %vm1232 = vcmp.eq.s32.totalorder %v1227, 1
        %vm1233 = vcmp.eq.s32.totalorder %v1231, 1
        %v1234 = vsel %vm1232, %v1220, 0.0
        %v1235 = vsel %vm1233, %v1221, 0.0
        %1236 = vset.pattern.permute.xlu0 6
        %1237 = vperm.xlu0 %1236, %v1058
        %v1238 = vpop.permute.xlu0 %1237
        %v1240 = vmul.f32 %v1234, %v1238
        %v1241 = vmul.f32 %v1235, %v1238
        %v1242 = vadd.f32 %v1213, %v1240
        %v1243 = vadd.f32 %v1214, %v1241
        %1244 = vrot.lane.b32.xlu0 %v475, 96
        %v1245 = vpop.permute.xlu0 %1244
        %1246 = vrot.lane.b32.xlu0 %v476, 96
        %v1247 = vpop.permute.xlu0 %1246
        %vm1248 = vcmp.lt.s32.totalorder %v1064, 96
        %v1249 = vsel %vm1248, %v1245, %v1247
        %v1250 = vsel %vm1248, %v1247, %v1245
        %vm1251 = vcmp.lt.s32.totalorder %v477, 14
        %v1252 = vsel %vm1251, 1, 0
        %v1253 = vlaneseq
        %v1254 = vshrl.u32 %v1253, 7
        %v1255 = vsub.s32 0, %v1254
        %v1256 = vrot.slane %v1252, %v1255
        %v1257 = vlaneseq
        %v1258 = vshrl.u32 %v1257, 7
        %v1259 = vsub.s32 1, %v1258
        %v1260 = vrot.slane %v1252, %v1259
        %vm1261 = vcmp.eq.s32.totalorder %v1256, 1
        %vm1262 = vcmp.eq.s32.totalorder %v1260, 1
        %v1263 = vsel %vm1261, %v1249, 0.0
        %v1264 = vsel %vm1262, %v1250, 0.0
        %1265 = vset.pattern.permute.xlu0 7
        %1266 = vperm.xlu0 %1265, %v1058
        %v1267 = vpop.permute.xlu0 %1266
        %v1269 = vmul.f32 %v1263, %v1267
        %v1270 = vmul.f32 %v1264, %v1267
        %v1271 = vadd.f32 %v1242, %v1269
        %v1272 = vadd.f32 %v1243, %v1270
        %vm1273 = vcmp.lt.s32.totalorder %v477, 13
        %v1274 = vsel %vm1273, 1, 0
        %v1275 = vlaneseq
        %v1276 = vshrl.u32 %v1275, 7
        %v1277 = vsub.s32 0, %v1276
        %v1278 = vrot.slane %v1274, %v1277
        %v1279 = vlaneseq
        %v1280 = vshrl.u32 %v1279, 7
        %v1281 = vsub.s32 1, %v1280
        %v1282 = vrot.slane %v1274, %v1281
        %vm1283 = vcmp.eq.s32.totalorder %v1278, 1
        %vm1284 = vcmp.eq.s32.totalorder %v1282, 1
        %v1285 = vsel %vm1283, %v1066, 0.0
        %v1286 = vsel %vm1284, %v1067, 0.0
        %1287 = vset.pattern.permute.xlu0 8
        %1288 = vperm.xlu0 %1287, %v1058
        %v1289 = vpop.permute.xlu0 %1288
        %v1291 = vmul.f32 %v1285, %v1289
        %v1292 = vmul.f32 %v1286, %v1289
        %v1293 = vadd.f32 %v1271, %v1291
        %v1294 = vadd.f32 %v1272, %v1292
        %vm1295 = vcmp.lt.s32.totalorder %v477, 12
        %v1296 = vsel %vm1295, 1, 0
        %v1297 = vlaneseq
        %v1298 = vshrl.u32 %v1297, 7
        %v1299 = vsub.s32 0, %v1298
        %v1300 = vrot.slane %v1296, %v1299
        %v1301 = vlaneseq
        %v1302 = vshrl.u32 %v1301, 7
        %v1303 = vsub.s32 1, %v1302
        %v1304 = vrot.slane %v1296, %v1303
        %vm1305 = vcmp.eq.s32.totalorder %v1300, 1
        %vm1306 = vcmp.eq.s32.totalorder %v1304, 1
        %v1307 = vsel %vm1305, %v1096, 0.0
        %v1308 = vsel %vm1306, %v1097, 0.0
        %1309 = vset.pattern.permute.xlu0 9
        %1310 = vperm.xlu0 %1309, %v1058
        %v1311 = vpop.permute.xlu0 %1310
        %v1313 = vmul.f32 %v1307, %v1311
        %v1314 = vmul.f32 %v1308, %v1311
        %v1315 = vadd.f32 %v1293, %v1313
        %v1316 = vadd.f32 %v1294, %v1314
        %vm1317 = vcmp.lt.s32.totalorder %v477, 11
        %v1318 = vsel %vm1317, 1, 0
        %v1319 = vlaneseq
        %v1320 = vshrl.u32 %v1319, 7
        %v1321 = vsub.s32 0, %v1320
        %v1322 = vrot.slane %v1318, %v1321
        %v1323 = vlaneseq
        %v1324 = vshrl.u32 %v1323, 7
        %v1325 = vsub.s32 1, %v1324
        %v1326 = vrot.slane %v1318, %v1325
        %vm1327 = vcmp.eq.s32.totalorder %v1322, 1
        %vm1328 = vcmp.eq.s32.totalorder %v1326, 1
        %v1329 = vsel %vm1327, %v1125, 0.0
        %v1330 = vsel %vm1328, %v1126, 0.0
        %1331 = vset.pattern.permute.xlu0 10
        %1332 = vperm.xlu0 %1331, %v1058
        %v1333 = vpop.permute.xlu0 %1332
        %v1335 = vmul.f32 %v1329, %v1333
        %v1336 = vmul.f32 %v1330, %v1333
        %v1337 = vadd.f32 %v1315, %v1335
        %v1338 = vadd.f32 %v1316, %v1336
        %v1339 = vld [vmem:[%s448] sm:$0xff]
        %1341 = vset.pattern.permute.xlu0 0
        %1342 = vperm.xlu0 %1341, %v1339
        %v1343 = vpop.permute.xlu0 %1342
        %v1345 = vadd.f32 %v1337, %v1343
        %v1346 = vadd.f32 %v1338, %v1343
        %1347 = vst [vmem:[%s472] sm:$0xff] %v1345
        %1348 = vst [vmem:[%s472 + $0x8] sm:$0xff] %v1346
      $region64: #{inception_dwconv_transpose2d.1} parent=51 // pred_fallthru
        _
      %s1349 = sadd.s32 %s25, 5
      %s1350 = sadd.s32 %s1349, %s26
      %p1351 = scmp.lt.s32.totalorder %s24, 1
      %s1352 = scalar_select %p1351, %s24, 1
      %p1353 = scmp.lt.s32.totalorder %s1350, 7
      %s1354 = scalar_select %p1353, %s1350, 7
      %s1355 = smul.addr %s1354, 2
      %s1356 = smul.addr %s1352, 16
      %s1357 = sadd.s32 %s1355, %s1356
      %s1358 = smul.addr %s1357, 8
      %s1359 = scalar_lea.vmem %s8, %s1358
      // Predicated region
      $region65: #{inception_dwconv_transpose2d.1} parent=51 // pred_check
        %p1360 = pneg %p271
      $region66: #{inception_dwconv_transpose2d.1} parent=51 // pred_check_branch
        %1362 = sbr.rel (%p1360) target = $region68
      $region67: #{inception_dwconv_transpose2d.1} parent=51 // pred_region
        %s1363 = sadd.s32 %s25, 5
        %s1364 = sadd.s32 %s1363, %s26
      $region68: #{inception_dwconv_transpose2d.1} parent=51 // pred_fallthru
        _
    $region52: #{inception_dwconv_transpose2d.1} parent=5 // pred_fallthru
      _
    %p1365 = scmp.le.s32.totalorder 2, %s14
    // Predicated region
    $region69: #{inception_dwconv_transpose2d.1} parent=5 // pred_check
      %p1366 = pneg %p1365
    $region70: #{inception_dwconv_transpose2d.1} parent=5 // pred_check_branch
      %1368 = sbr.rel (%p1366) target = $region72
    $region71: #{inception_dwconv_transpose2d.1} parent=5 // pred_region
      %s1369 = ssub.s32 %s14, 2
      // Predicated region
      $region73: #{inception_dwconv_transpose2d.1} parent=71 // pred_check
        %p1370 = pneg %p277
      $region74: #{inception_dwconv_transpose2d.1} parent=71 // pred_check_branch
        %1372 = sbr.rel (%p1370) target = $region76
      $region75: #{inception_dwconv_transpose2d.1} parent=71 // pred_region
        %s1373 = sadd.s32 %s28, 5
        %s1374 = sadd.s32 %s1373, %s29
        %p1375 = scmp.lt.s32.totalorder %s27, 1
        %s1376 = scalar_select %p1375, %s27, 1
        %p1377 = scmp.lt.s32.totalorder %s1374, 7
        %s1378 = scalar_select %p1377, %s1374, 7
        %s1379 = smul.addr %s1378, 2
        %s1380 = smul.addr %s1376, 16
        %s1381 = sadd.s32 %s1379, %s1380
        %s1382 = smul.addr %s1381, 8
        %s1383 = scalar_lea.vmem %s8, %s1382
      $region76: #{inception_dwconv_transpose2d.1} parent=71 // pred_fallthru
        _
    $region72: #{inception_dwconv_transpose2d.1} parent=5 // pred_fallthru
      _
  $region6: #{inception_dwconv_transpose2d.1} parent=0 // loop_footer
    %s18 = sadd.s32 1, %s14
  $region7: #{inception_dwconv_transpose2d.1} parent=0 // loop_footer_branch
    %13 = sbr.rel target = $region3
  $region8: #{inception_dwconv_transpose2d.1} parent=0 // loop_exit
    _

</llo_original>
